<compile_context>
chip_gen: v6e
topology: v6e:2x2x1
jax: 0.10.0
libtpu: 0.0.40
codegen_flags: <defaults>
</compile_context>

<pallas_src>
import functools

import jax
import jax.numpy as jnp
from jax.experimental import pallas as pl
from jax.experimental.pallas import tpu as pltpu


# -----------------------------------------------------------------------------
# Kernel
# -----------------------------------------------------------------------------
def _residual_block_kernel(*refs, th, hb, w, cin, cout, has_proj,
                           im2col1, im2col2):
    """One (batch, row-strip) step of the fused residual block.

    Activations are channel-major with the spatial extent flattened onto the
    lane axis: input strip (1, Cin, th*W), output strip (1, Cout, th*W).
    """
    if has_proj:
        (xm_ref, xt_ref, xb_ref, w1_ref, b1_ref, w2_ref, b2_ref,
         ws_ref, bs_ref, o_ref) = refs
    else:
        (xm_ref, xt_ref, xb_ref, w1_ref, b1_ref, w2_ref, b2_ref, o_ref) = refs

    i = pl.program_id(1)
    n_strips = pl.num_programs(1)
    m1 = (th + 2) * w          # conv1 evaluated for th+2 rows (1 halo row each side)
    m2 = th * w                # conv2 / output rows of this strip

    # Boundary-strip predicates: out-of-image halo rows are zero padding.
    top_live = (i > 0).astype(jnp.float32)
    bot_live = (i < n_strips - 1).astype(jnp.float32)

    def conv3x3(xpad_bf, m, wmat_ref, c_in, use_im2col):
        """3x3 'same' conv on a channel-major, lane-flattened padded slab.

        xpad_bf: (c_in, 1 + (rows+2)*w + 2) bf16.  Each tap is the static slice
        starting at dy*w + dx of length m; columns that would read outside the
        image are masked to zero.  Returns (cout, m) f32.
        """
        wm = wmat_ref[...]                                      # (cout, 9*c_in) bf16
        col = jax.lax.broadcasted_iota(jnp.int32, (1, m), 1) % w
        ok_l = col != 0            # reading column x-1 is valid
        ok_r = col != (w - 1)      # reading column x+1 is valid
        taps = []
        for dy in range(3):
            for dx in range(3):
                t = xpad_bf[:, dy * w + dx: dy * w + dx + m]
                if dx == 0:
                    t = jnp.where(ok_l, t, jnp.zeros_like(t))
                elif dx == 2:
                    t = jnp.where(ok_r, t, jnp.zeros_like(t))
                taps.append(t)
        if use_im2col:
            # Small C: a single MXU matmul with contraction depth K = 9*c_in.
            patches = jnp.concatenate(taps, axis=0)             # (9*c_in, m)
            return jnp.dot(wm, patches, preferred_element_type=jnp.float32)
        # Large C: 9 accumulating K = c_in matmuls (no 9x im2col materialization).
        out = None
        for k, t in enumerate(taps):
            d = jnp.dot(wm[:, k * c_in:(k + 1) * c_in], t,
                        preferred_element_type=jnp.float32)
            out = d if out is None else out + d
        return out

    # ---- zero-padded input slab: [1 zero][2 halo rows][strip][2 halo rows][2 zeros]
    x_main = xm_ref[0]                                          # (cin, th*w) f32
    top = xt_ref[0, :, (hb - 2) * w: hb * w] * top_live         # image rows r0-2, r0-1
    bot = xb_ref[0, :, : 2 * w] * bot_live                      # image rows r0+th, r0+th+1
    xpad = jnp.concatenate(
        [jnp.zeros((cin, 1), jnp.float32), top, x_main, bot,
         jnp.zeros((cin, 2), jnp.float32)], axis=-1).astype(jnp.bfloat16)

    # ---- conv1 (+bias, LeakyReLU 0.1) over th+2 rows --------------------------
    a1 = conv3x3(xpad, m1, w1_ref, cin, im2col1) + b1_ref[...]
    a1 = jnp.maximum(a1, 0.1 * a1)

    # ---- conv2 zero padding: out-of-image conv1 halo rows are zeroed only on
    # boundary strips (a (cout, w)-sized scale), plus 1 zero column front/back --
    zc = jnp.zeros((cout, 1), jnp.float32)
    y1pad = jnp.concatenate(
        [zc, a1[:, :w] * top_live, a1[:, w: m1 - w], a1[:, m1 - w:] * bot_live, zc],
        axis=-1).astype(jnp.bfloat16)

    # ---- conv2 (+bias, LeakyReLU 0.1) over the strip's th rows ----------------
    a2 = conv3x3(y1pad, m2, w2_ref, cout, im2col2) + b2_ref[...]
    a2 = jnp.maximum(a2, 0.1 * a2)

    # ---- shortcut --------------------------------------------------------------
    if has_proj:   # 1x1 projection conv, operand-swapped / channel-major
        ident = jnp.dot(ws_ref[...], x_main.astype(jnp.bfloat16),
                        preferred_element_type=jnp.float32) + bs_ref[...]
    else:          # identity: exact f32 residual add (no bf16 rounding)
        ident = x_main

    o_ref[0] = a2 + ident                                       # (cout, th*w) == NCHW strip


# -----------------------------------------------------------------------------
# Tiling / VMEM helpers
# -----------------------------------------------------------------------------
def _vmem_capacity_bytes():
    """Physical VMEM per TensorCore (128 MiB v5e/v6e, 64 MiB v7x)."""
    try:
        return int(pltpu.get_tpu_info().vmem_capacity_bytes)
    except Exception:
        return 64 * 1024 * 1024            # conservative fallback (v7x size)


def _halo_rows(tile_h, w):
    """Smallest halo-block row count whose flattened width is lane-tileable."""
    for hb in range(2, tile_h):
        if tile_h % hb == 0 and (hb * w) % 128 == 0:
            return hb
    return tile_h


def _estimate_vmem_bytes(th, w, cin, cout, hb):
    """Rough per-step footprint: double-buffered blocks + in-kernel temporaries."""
    m1, m2 = (th + 2) * w, th * w
    b = 0
    b += 2 * cin * m2 * 4                                  # main input strip (x2 buffers)
    b += 2 * 2 * cin * hb * w * 4                          # top/bottom halo blocks
    b += 2 * cout * m2 * 4                                 # output strip
    b += 2 * 2 * (9 * cin * cout + 9 * cout * cout + cin * cout) + 16 * cout
    b += cin * (th + 4) * w * 6                            # padded slab (f32 + bf16)
    b += 9 * cin * m1 * 2 + 9 * cout * m2 * 2              # im2col patches / tap slices
    b += cout * m1 * 6 + cout * m2 * 8                     # conv1/conv2 activations
    return int(b * 1.25)


def _pick_tile_h(h, w, cin, cout, n, budget):
    """Largest row strip that fits the VMEM budget, keeping >= 2 grid steps."""
    cands = sorted({t for t in (8, 16, 32, 64, 128, h) if t <= h}, reverse=True)
    valid = [t for t in cands if h % t == 0 and (t == h or (t * w) % 128 == 0)]
    if not valid:
        return h                                           # full-image block is always legal
    fitting = [t for t in valid
               if _estimate_vmem_bytes(t, w, cin, cout, _halo_rows(t, w)) <= budget]
    if not fitting:
        fitting = valid[-1:]
    for t in fitting:                                      # largest first
        if n * (h // t) >= 2:                              # megacore / 2-TC wants >= 2 steps
            return t
    return fitting[0]


# -----------------------------------------------------------------------------
# Wrapper
# -----------------------------------------------------------------------------
@functools.partial(jax.jit, static_argnames=("tile_h", "im2col_max_c"))
def residual_block_pallas(x, w1, b1, w2, b2, ws=None, bs=None, *,
                          tile_h=None, im2col_max_c=128):
    """Fused ResidualBlock forward.

    x  : (N, Cin, H, W) f32 (NCHW, PyTorch layout)
    w1 : (Cout, Cin, 3, 3),  b1: (Cout,)   conv1
    w2 : (Cout, Cout, 3, 3), b2: (Cout,)   conv2
    ws : (Cout, Cin, 1, 1) or None, bs: (Cout,) or None   (1x1 projection shortcut)
    Returns (N, Cout, H, W) f32.
    """
    N, Cin, H, W = x.shape
    Cout = w1.shape[0]
    has_proj = ws is not None

    cap = _vmem_capacity_bytes()
    budget = int(cap * 0.72)               # ~46 MiB on v7x, ~92 MiB on v5e/v6e

    if tile_h is None:
        th = _pick_tile_h(H, W, Cin, Cout, N, budget)
    else:
        th = int(tile_h)
        if H % th != 0:
            raise ValueError(f"tile_h={th} must divide H={H}")
        if th != H and (th * W) % 128 != 0:
            raise ValueError("tile_h*W must be a multiple of 128 (or tile_h == H)")
    hb = _halo_rows(th, W)
    n_strips = H // th
    r = th // hb                           # halo blocks per strip
    n_hblk = H // hb

    # Layout plumbing (free / tiny): flatten spatial onto the lane axis; weights
    # go to tap-major (Cout, 9*C) bf16.  x stays f32 in HBM: the kernel casts to
    # bf16 only for MXU operands and keeps the f32 strip for the exact identity add.
    xr = x.reshape(N, Cin, H * W)
    w1m = jnp.transpose(w1, (0, 2, 3, 1)).reshape(Cout, 9 * Cin).astype(jnp.bfloat16)
    w2m = jnp.transpose(w2, (0, 2, 3, 1)).reshape(Cout, 9 * Cout).astype(jnp.bfloat16)
    b1m = b1.reshape(Cout, 1).astype(jnp.float32)
    b2m = b2.reshape(Cout, 1).astype(jnp.float32)

    in_specs = [
        # current strip plus small haloed row blocks of the same HBM array
        pl.BlockSpec((1, Cin, th * W), lambda b, i: (b, 0, i)),
        pl.BlockSpec((1, Cin, hb * W),
                     lambda b, i: (b, 0, jnp.maximum(i * r - 1, 0))),
        pl.BlockSpec((1, Cin, hb * W),
                     lambda b, i: (b, 0, jnp.minimum((i + 1) * r, n_hblk - 1))),
        pl.BlockSpec((Cout, 9 * Cin), lambda b, i: (0, 0)),
        pl.BlockSpec((Cout, 1), lambda b, i: (0, 0)),
        pl.BlockSpec((Cout, 9 * Cout), lambda b, i: (0, 0)),
        pl.BlockSpec((Cout, 1), lambda b, i: (0, 0)),
    ]
    args = [xr, xr, xr, w1m, b1m, w2m, b2m]
    if has_proj:
        in_specs += [pl.BlockSpec((Cout, Cin), lambda b, i: (0, 0)),
                     pl.BlockSpec((Cout, 1), lambda b, i: (0, 0))]
        args += [ws.reshape(Cout, Cin).astype(jnp.bfloat16),
                 bs.reshape(Cout, 1).astype(jnp.float32)]

    est = _estimate_vmem_bytes(th, W, Cin, Cout, hb)
    vmem_limit = int(min(budget, max(32 * 1024 * 1024, 2 * est)))

    kernel = functools.partial(
        _residual_block_kernel, th=th, hb=hb, w=W, cin=Cin, cout=Cout,
        has_proj=has_proj,
        im2col1=(Cin <= im2col_max_c), im2col2=(Cout <= im2col_max_c))

    out_flat = pl.pallas_call(
        kernel,
        out_shape=jax.ShapeDtypeStruct((N, Cout, H * W), jnp.float32),
        grid_spec=pltpu.PrefetchScalarGridSpec(
            num_scalar_prefetch=0,
            grid=(N, n_strips),
            in_specs=in_specs,
            out_specs=pl.BlockSpec((1, Cout, th * W), lambda b, i: (b, 0, i)),
        ),
        compiler_params=pltpu.CompilerParams(
            dimension_semantics=("parallel", "parallel"),
            vmem_limit_bytes=vmem_limit),
    )(*args)

    return out_flat.reshape(N, Cout, H, W)   # channel-major result == NCHW already


# -----------------------------------------------------------------------------
# Params + pure-JAX reference
# -----------------------------------------------------------------------------
def make_params(key, in_channels, out_channels, kernel_size=3):
    """Deterministic PyTorch-style uniform init, OIHW weights."""
    def conv_init(k, cout, cin, kh, kw):
        bound = 1.0 / (cin * kh * kw) ** 0.5
        kw_key, kb_key = jax.random.split(k)
        wgt = jax.random.uniform(kw_key, (cout, cin, kh, kw), jnp.float32, -bound, bound)
        bias = jax.random.uniform(kb_key, (cout,), jnp.float32, -bound, bound)
        return wgt, bias

    k1, k2, k3 = jax.random.split(key, 3)
    w1, b1 = conv_init(k1, out_channels, in_channels, kernel_size, kernel_size)
    w2, b2 = conv_init(k2, out_channels, out_channels, kernel_size, kernel_size)
    if in_channels != out_channels:
        ws, bs = conv_init(k3, out_channels, in_channels, 1, 1)
    else:
        ws, bs = None, None
    return w1, b1, w2, b2, ws, bs


def residual_block_reference(x, w1, b1, w2, b2, ws=None, bs=None):
    """Pure-JAX f32 reference (lax conv, NCHW/OIHW) matching the PyTorch module."""
    dn = ("NCHW", "OIHW", "NCHW")

    def conv(xx, wgt, bias, pad):
        y = jax.lax.conv_general_dilated(xx, wgt, (1, 1), ((pad, pad), (pad, pad)),
                                         dimension_numbers=dn)
        return y + bias.reshape(1, -1, 1, 1)

    def lrelu(v):
        return jnp.where(v >= 0, v, 0.1 * v)

    out = lrelu(conv(x, w1, b1, 1))
    out = lrelu(conv(out, w2, b2, 1))
    ident = x if ws is None else conv(x, ws, bs, 0)
    return out + ident


if __name__ == "__main__":
    key = jax.random.PRNGKey(0)
    k_x, k_p, k_p2 = jax.random.split(key, 3)

    # Case 1: projection shortcut (Cin != Cout), single-im2col-matmul path.
    N, Cin, Cout, H, W = 2, 4, 8, 16, 16
    x = jax.random.normal(k_x, (N, Cin, H, W), jnp.float32)
    params = make_params(k_p, Cin, Cout)
    out = jax.block_until_ready(residual_block_pallas(x, *params))
    ref = residual_block_reference(x, *params)
    assert out.shape == (N, Cout, H, W), out.shape
    assert jnp.allclose(out, ref, atol=6e-2, rtol=6e-2), \
        float(jnp.max(jnp.abs(out - ref)))

    # Case 2: identity shortcut (Cin == Cout) -> exact f32 residual add.
    x8 = jax.random.normal(k_x, (N, Cout, H, W), jnp.float32)
    params8 = make_params(k_p2, Cout, Cout)
    out8 = jax.block_until_ready(residual_block_pallas(x8, *params8))
    ref8 = residual_block_reference(x8, *params8)
    assert jnp.allclose(out8, ref8, atol=6e-2, rtol=6e-2), \
        float(jnp.max(jnp.abs(out8 - ref8)))

    # Case 3: force the per-tap accumulating-matmul path (the large-C crossover).
    out_pt = jax.block_until_ready(residual_block_pallas(x, *params, im2col_max_c=0))
    assert jnp.allclose(out_pt, ref, atol=6e-2, rtol=6e-2), \
        float(jnp.max(jnp.abs(out_pt - ref)))

    print("KERNEL_OK")
</pallas_src>

<mosaic_0001>
module attributes {stable_mosaic.version = 11 : i64} {
  func.func @_residual_block_kernel(%arg0: i32, %arg1: i32, %arg2: memref<1x4x256xf32, #tpu.memory_space<vmem>>, %arg3: memref<1x4x128xf32, #tpu.memory_space<vmem>>, %arg4: memref<1x4x128xf32, #tpu.memory_space<vmem>>, %arg5: memref<8x36xbf16, #tpu.memory_space<vmem>>, %arg6: memref<8x1xf32, #tpu.memory_space<vmem>>, %arg7: memref<8x72xbf16, #tpu.memory_space<vmem>>, %arg8: memref<8x1xf32, #tpu.memory_space<vmem>>, %arg9: memref<8x4xbf16, #tpu.memory_space<vmem>>, %arg10: memref<8x1xf32, #tpu.memory_space<vmem>>, %arg11: memref<1x8x256xf32, #tpu.memory_space<vmem>>) attributes {dimension_semantics = [#tpu.dimension_semantics<parallel>, #tpu.dimension_semantics<parallel>], iteration_bounds = array<i64: 2, 1>, scalar_prefetch = 0 : i64, scratch_operands = 0 : i64, tpu.core_type = #tpu.core_type<tc>, window_params = [{transform_indices = @transform_0, window_bounds = array<i64: 1, 4, 256>}, {transform_indices = @transform_1, window_bounds = array<i64: 1, 4, 128>}, {transform_indices = @transform_2, window_bounds = array<i64: 1, 4, 128>}, {pipeline_mode = #tpu.pipeline_mode<synchronous>, transform_indices = @transform_3, window_bounds = array<i64: 8, 36>}, {pipeline_mode = #tpu.pipeline_mode<synchronous>, transform_indices = @transform_4, window_bounds = array<i64: 8, 1>}, {pipeline_mode = #tpu.pipeline_mode<synchronous>, transform_indices = @transform_5, window_bounds = array<i64: 8, 72>}, {pipeline_mode = #tpu.pipeline_mode<synchronous>, transform_indices = @transform_6, window_bounds = array<i64: 8, 1>}, {pipeline_mode = #tpu.pipeline_mode<synchronous>, transform_indices = @transform_7, window_bounds = array<i64: 8, 4>}, {pipeline_mode = #tpu.pipeline_mode<synchronous>, transform_indices = @transform_8, window_bounds = array<i64: 8, 1>}, {transform_indices = @transform_9, window_bounds = array<i64: 1, 8, 256>}]} {
    %c0_i32 = arith.constant 0 : i32
    %0 = arith.cmpi sgt, %arg1, %c0_i32 : i32
    %1 = arith.extui %0 : i1 to i32
    %2 = arith.sitofp %1 : i32 to f32
    %c0_i32_0 = arith.constant 0 : i32
    %3 = arith.cmpi slt, %arg1, %c0_i32_0 : i32
    %4 = arith.extui %3 : i1 to i32
    %5 = arith.sitofp %4 : i32 to f32
    %c0 = arith.constant 0 : index
    %c0_1 = arith.constant 0 : index
    %c0_2 = arith.constant 0 : index
    %6 = vector.load %arg2[%c0, %c0_1, %c0_2] : memref<1x4x256xf32, #tpu.memory_space<vmem>>, vector<1x4x256xf32>
    %7 = vector.shape_cast %6 : vector<1x4x256xf32> to vector<4x256xf32>
    %c0_3 = arith.constant 0 : index
    %c0_4 = arith.constant 0 : index
    %c96 = arith.constant 96 : index
    %8 = vector.load %arg3[%c0_3, %c0_4, %c96] : memref<1x4x128xf32, #tpu.memory_space<vmem>>, vector<1x4x32xf32>
    %9 = vector.shape_cast %8 : vector<1x4x32xf32> to vector<4x32xf32>
    %10 = vector.broadcast %2 : f32 to vector<4x32xf32>
    %11 = arith.mulf %9, %10 : vector<4x32xf32>
    %c0_5 = arith.constant 0 : index
    %c0_6 = arith.constant 0 : index
    %c0_7 = arith.constant 0 : index
    %12 = vector.load %arg4[%c0_5, %c0_6, %c0_7] : memref<1x4x128xf32, #tpu.memory_space<vmem>>, vector<1x4x32xf32>
    %13 = vector.shape_cast %12 : vector<1x4x32xf32> to vector<4x32xf32>
    %14 = vector.broadcast %5 : f32 to vector<4x32xf32>
    %15 = arith.mulf %13, %14 : vector<4x32xf32>
    %cst = arith.constant 0.000000e+00 : f32
    %16 = vector.broadcast %cst : f32 to vector<4x1xf32>
    %cst_8 = arith.constant 0.000000e+00 : f32
    %17 = vector.broadcast %cst_8 : f32 to vector<4x2xf32>
    %18 = tpu.concatenate %16, %11, %7, %15, %17 in 1 : vector<4x1xf32>, vector<4x32xf32>, vector<4x256xf32>, vector<4x32xf32>, vector<4x2xf32> -> vector<4x323xf32>
    %19 = arith.truncf %18 : vector<4x323xf32> to vector<4x323xbf16>
    %c0_9 = arith.constant 0 : index
    %c0_10 = arith.constant 0 : index
    %20 = vector.load %arg5[%c0_9, %c0_10] : memref<8x36xbf16, #tpu.memory_space<vmem>>, vector<8x36xbf16>
    %21 = tpu.iota {dimensions = array<i32: 1>} : vector<1x288xi32>
    %c16_i32 = arith.constant 16 : i32
    %c0_i32_11 = arith.constant 0 : i32
    %22 = arith.cmpi eq, %c16_i32, %c0_i32_11 : i32
    %c1_i32 = arith.constant 1 : i32
    %23 = arith.select %22, %c1_i32, %c16_i32 : i32
    %24 = vector.broadcast %23 : i32 to vector<1x288xi32>
    %25 = arith.remsi %21, %24 : vector<1x288xi32>
    %c0_i32_12 = arith.constant 0 : i32
    %26 = vector.broadcast %c0_i32_12 : i32 to vector<1x288xi32>
    %27 = arith.cmpi ne, %25, %26 : vector<1x288xi32>
    %c0_i32_13 = arith.constant 0 : i32
    %28 = vector.broadcast %c0_i32_13 : i32 to vector<1x288xi32>
    %29 = arith.cmpi slt, %25, %28 : vector<1x288xi32>
    %c0_i32_14 = arith.constant 0 : i32
    %30 = arith.cmpi slt, %23, %c0_i32_14 : i32
    %31 = vector.broadcast %30 : i1 to vector<1x288xi1>
    %32 = vector.broadcast %31 : vector<1x288xi1> to vector<1x288xi1>
    %33 = arith.xori %29, %32 : vector<1x288xi1>
    %34 = arith.andi %33, %27 : vector<1x288xi1>
    %35 = vector.broadcast %23 : i32 to vector<1x288xi32>
    %36 = arith.addi %25, %35 : vector<1x288xi32>
    %37 = arith.select %34, %36, %25 : vector<1x288xi1>, vector<1x288xi32>
    %c0_i32_15 = arith.constant 0 : i32
    %38 = vector.broadcast %c0_i32_15 : i32 to vector<1x288xi32>
    %39 = arith.cmpi ne, %37, %38 : vector<1x288xi32>
    %c15_i32 = arith.constant 15 : i32
    %40 = vector.broadcast %c15_i32 : i32 to vector<1x288xi32>
    %41 = arith.cmpi ne, %37, %40 : vector<1x288xi32>
    %42 = vector.extract_strided_slice %19 {offsets = [0, 0], sizes = [4, 288], strides = [1, 1]} : vector<4x323xbf16> to vector<4x288xbf16>
    %cst_16 = arith.constant 0.000000e+00 : bf16
    %43 = vector.broadcast %cst_16 : bf16 to vector<4x288xbf16>
    %44 = vector.shape_cast %39 : vector<1x288xi1> to vector<1x288xi1>
    %45 = vector.broadcast %44 : vector<1x288xi1> to vector<4x288xi1>
    %46 = arith.select %45, %42, %43 : vector<4x288xi1>, vector<4x288xbf16>
    %47 = vector.extract_strided_slice %19 {offsets = [0, 1], sizes = [4, 288], strides = [1, 1]} : vector<4x323xbf16> to vector<4x288xbf16>
    %48 = vector.extract_strided_slice %19 {offsets = [0, 2], sizes = [4, 288], strides = [1, 1]} : vector<4x323xbf16> to vector<4x288xbf16>
    %cst_17 = arith.constant 0.000000e+00 : bf16
    %49 = vector.broadcast %cst_17 : bf16 to vector<4x288xbf16>
    %50 = vector.shape_cast %41 : vector<1x288xi1> to vector<1x288xi1>
    %51 = vector.broadcast %50 : vector<1x288xi1> to vector<4x288xi1>
    %52 = arith.select %51, %48, %49 : vector<4x288xi1>, vector<4x288xbf16>
    %53 = vector.extract_strided_slice %19 {offsets = [0, 16], sizes = [4, 288], strides = [1, 1]} : vector<4x323xbf16> to vector<4x288xbf16>
    %cst_18 = arith.constant 0.000000e+00 : bf16
    %54 = vector.broadcast %cst_18 : bf16 to vector<4x288xbf16>
    %55 = vector.shape_cast %39 : vector<1x288xi1> to vector<1x288xi1>
    %56 = vector.broadcast %55 : vector<1x288xi1> to vector<4x288xi1>
    %57 = arith.select %56, %53, %54 : vector<4x288xi1>, vector<4x288xbf16>
    %58 = vector.extract_strided_slice %19 {offsets = [0, 17], sizes = [4, 288], strides = [1, 1]} : vector<4x323xbf16> to vector<4x288xbf16>
    %59 = vector.extract_strided_slice %19 {offsets = [0, 18], sizes = [4, 288], strides = [1, 1]} : vector<4x323xbf16> to vector<4x288xbf16>
    %cst_19 = arith.constant 0.000000e+00 : bf16
    %60 = vector.broadcast %cst_19 : bf16 to vector<4x288xbf16>
    %61 = vector.shape_cast %41 : vector<1x288xi1> to vector<1x288xi1>
    %62 = vector.broadcast %61 : vector<1x288xi1> to vector<4x288xi1>
    %63 = arith.select %62, %59, %60 : vector<4x288xi1>, vector<4x288xbf16>
    %64 = vector.extract_strided_slice %19 {offsets = [0, 32], sizes = [4, 288], strides = [1, 1]} : vector<4x323xbf16> to vector<4x288xbf16>
    %cst_20 = arith.constant 0.000000e+00 : bf16
    %65 = vector.broadcast %cst_20 : bf16 to vector<4x288xbf16>
    %66 = vector.shape_cast %39 : vector<1x288xi1> to vector<1x288xi1>
    %67 = vector.broadcast %66 : vector<1x288xi1> to vector<4x288xi1>
    %68 = arith.select %67, %64, %65 : vector<4x288xi1>, vector<4x288xbf16>
    %69 = vector.extract_strided_slice %19 {offsets = [0, 33], sizes = [4, 288], strides = [1, 1]} : vector<4x323xbf16> to vector<4x288xbf16>
    %70 = vector.extract_strided_slice %19 {offsets = [0, 34], sizes = [4, 288], strides = [1, 1]} : vector<4x323xbf16> to vector<4x288xbf16>
    %cst_21 = arith.constant 0.000000e+00 : bf16
    %71 = vector.broadcast %cst_21 : bf16 to vector<4x288xbf16>
    %72 = vector.shape_cast %41 : vector<1x288xi1> to vector<1x288xi1>
    %73 = vector.broadcast %72 : vector<1x288xi1> to vector<4x288xi1>
    %74 = arith.select %73, %70, %71 : vector<4x288xi1>, vector<4x288xbf16>
    %75 = tpu.concatenate %46, %47, %52, %57, %58, %63, %68, %69, %74 in 0 : vector<4x288xbf16>, vector<4x288xbf16>, vector<4x288xbf16>, vector<4x288xbf16>, vector<4x288xbf16>, vector<4x288xbf16>, vector<4x288xbf16>, vector<4x288xbf16>, vector<4x288xbf16> -> vector<36x288xbf16>
    %cst_22 = arith.constant dense<0.000000e+00> : vector<8x288xf32>
    %76 = tpu.matmul %20, %75, %cst_22 {dimension_numbers = #tpu.dot_dimension_numbers<[1], [0], [0], [1], [0, 0, 1, 1], [], []>} : vector<8x36xbf16>, vector<36x288xbf16>, vector<8x288xf32> -> vector<8x288xf32>
    %c0_23 = arith.constant 0 : index
    %c0_24 = arith.constant 0 : index
    %77 = vector.load %arg6[%c0_23, %c0_24] : memref<8x1xf32, #tpu.memory_space<vmem>>, vector<8x1xf32>
    %78 = vector.broadcast %77 : vector<8x1xf32> to vector<8x288xf32>
    %79 = arith.addf %76, %78 : vector<8x288xf32>
    %cst_25 = arith.constant 1.000000e-01 : f32
    %80 = vector.broadcast %cst_25 : f32 to vector<8x288xf32>
    %81 = arith.mulf %80, %79 : vector<8x288xf32>
    %82 = arith.maximumf %79, %81 : vector<8x288xf32>
    %cst_26 = arith.constant 0.000000e+00 : f32
    %83 = vector.broadcast %cst_26 : f32 to vector<8x1xf32>
    %84 = vector.extract_strided_slice %82 {offsets = [0, 0], sizes = [8, 16], strides = [1, 1]} : vector<8x288xf32> to vector<8x16xf32>
    %85 = vector.broadcast %2 : f32 to vector<8x16xf32>
    %86 = arith.mulf %84, %85 : vector<8x16xf32>
    %87 = vector.extract_strided_slice %82 {offsets = [0, 16], sizes = [8, 256], strides = [1, 1]} : vector<8x288xf32> to vector<8x256xf32>
    %88 = vector.extract_strided_slice %82 {offsets = [0, 272], sizes = [8, 16], strides = [1, 1]} : vector<8x288xf32> to vector<8x16xf32>
    %89 = vector.broadcast %5 : f32 to vector<8x16xf32>
    %90 = arith.mulf %88, %89 : vector<8x16xf32>
    %91 = tpu.concatenate %83, %86, %87, %90, %83 in 1 : vector<8x1xf32>, vector<8x16xf32>, vector<8x256xf32>, vector<8x16xf32>, vector<8x1xf32> -> vector<8x290xf32>
    %92 = arith.truncf %91 : vector<8x290xf32> to vector<8x290xbf16>
    %c0_27 = arith.constant 0 : index
    %c0_28 = arith.constant 0 : index
    %93 = vector.load %arg7[%c0_27, %c0_28] : memref<8x72xbf16, #tpu.memory_space<vmem>>, vector<8x72xbf16>
    %94 = tpu.iota {dimensions = array<i32: 1>} : vector<1x256xi32>
    %c16_i32_29 = arith.constant 16 : i32
    %c0_i32_30 = arith.constant 0 : i32
    %95 = arith.cmpi eq, %c16_i32_29, %c0_i32_30 : i32
    %c1_i32_31 = arith.constant 1 : i32
    %96 = arith.select %95, %c1_i32_31, %c16_i32_29 : i32
    %97 = vector.broadcast %96 : i32 to vector<1x256xi32>
    %98 = arith.remsi %94, %97 : vector<1x256xi32>
    %c0_i32_32 = arith.constant 0 : i32
    %99 = vector.broadcast %c0_i32_32 : i32 to vector<1x256xi32>
    %100 = arith.cmpi ne, %98, %99 : vector<1x256xi32>
    %c0_i32_33 = arith.constant 0 : i32
    %101 = vector.broadcast %c0_i32_33 : i32 to vector<1x256xi32>
    %102 = arith.cmpi slt, %98, %101 : vector<1x256xi32>
    %c0_i32_34 = arith.constant 0 : i32
    %103 = arith.cmpi slt, %96, %c0_i32_34 : i32
    %104 = vector.broadcast %103 : i1 to vector<1x256xi1>
    %105 = vector.broadcast %104 : vector<1x256xi1> to vector<1x256xi1>
    %106 = arith.xori %102, %105 : vector<1x256xi1>
    %107 = arith.andi %106, %100 : vector<1x256xi1>
    %108 = vector.broadcast %96 : i32 to vector<1x256xi32>
    %109 = arith.addi %98, %108 : vector<1x256xi32>
    %110 = arith.select %107, %109, %98 : vector<1x256xi1>, vector<1x256xi32>
    %c0_i32_35 = arith.constant 0 : i32
    %111 = vector.broadcast %c0_i32_35 : i32 to vector<1x256xi32>
    %112 = arith.cmpi ne, %110, %111 : vector<1x256xi32>
    %c15_i32_36 = arith.constant 15 : i32
    %113 = vector.broadcast %c15_i32_36 : i32 to vector<1x256xi32>
    %114 = arith.cmpi ne, %110, %113 : vector<1x256xi32>
    %115 = vector.extract_strided_slice %92 {offsets = [0, 0], sizes = [8, 256], strides = [1, 1]} : vector<8x290xbf16> to vector<8x256xbf16>
    %cst_37 = arith.constant 0.000000e+00 : bf16
    %116 = vector.broadcast %cst_37 : bf16 to vector<8x256xbf16>
    %117 = vector.shape_cast %112 : vector<1x256xi1> to vector<1x256xi1>
    %118 = vector.broadcast %117 : vector<1x256xi1> to vector<8x256xi1>
    %119 = arith.select %118, %115, %116 : vector<8x256xi1>, vector<8x256xbf16>
    %120 = vector.extract_strided_slice %92 {offsets = [0, 1], sizes = [8, 256], strides = [1, 1]} : vector<8x290xbf16> to vector<8x256xbf16>
    %121 = vector.extract_strided_slice %92 {offsets = [0, 2], sizes = [8, 256], strides = [1, 1]} : vector<8x290xbf16> to vector<8x256xbf16>
    %cst_38 = arith.constant 0.000000e+00 : bf16
    %122 = vector.broadcast %cst_38 : bf16 to vector<8x256xbf16>
    %123 = vector.shape_cast %114 : vector<1x256xi1> to vector<1x256xi1>
    %124 = vector.broadcast %123 : vector<1x256xi1> to vector<8x256xi1>
    %125 = arith.select %124, %121, %122 : vector<8x256xi1>, vector<8x256xbf16>
    %126 = vector.extract_strided_slice %92 {offsets = [0, 16], sizes = [8, 256], strides = [1, 1]} : vector<8x290xbf16> to vector<8x256xbf16>
    %cst_39 = arith.constant 0.000000e+00 : bf16
    %127 = vector.broadcast %cst_39 : bf16 to vector<8x256xbf16>
    %128 = vector.shape_cast %112 : vector<1x256xi1> to vector<1x256xi1>
    %129 = vector.broadcast %128 : vector<1x256xi1> to vector<8x256xi1>
    %130 = arith.select %129, %126, %127 : vector<8x256xi1>, vector<8x256xbf16>
    %131 = vector.extract_strided_slice %92 {offsets = [0, 17], sizes = [8, 256], strides = [1, 1]} : vector<8x290xbf16> to vector<8x256xbf16>
    %132 = vector.extract_strided_slice %92 {offsets = [0, 18], sizes = [8, 256], strides = [1, 1]} : vector<8x290xbf16> to vector<8x256xbf16>
    %cst_40 = arith.constant 0.000000e+00 : bf16
    %133 = vector.broadcast %cst_40 : bf16 to vector<8x256xbf16>
    %134 = vector.shape_cast %114 : vector<1x256xi1> to vector<1x256xi1>
    %135 = vector.broadcast %134 : vector<1x256xi1> to vector<8x256xi1>
    %136 = arith.select %135, %132, %133 : vector<8x256xi1>, vector<8x256xbf16>
    %137 = vector.extract_strided_slice %92 {offsets = [0, 32], sizes = [8, 256], strides = [1, 1]} : vector<8x290xbf16> to vector<8x256xbf16>
    %cst_41 = arith.constant 0.000000e+00 : bf16
    %138 = vector.broadcast %cst_41 : bf16 to vector<8x256xbf16>
    %139 = vector.shape_cast %112 : vector<1x256xi1> to vector<1x256xi1>
    %140 = vector.broadcast %139 : vector<1x256xi1> to vector<8x256xi1>
    %141 = arith.select %140, %137, %138 : vector<8x256xi1>, vector<8x256xbf16>
    %142 = vector.extract_strided_slice %92 {offsets = [0, 33], sizes = [8, 256], strides = [1, 1]} : vector<8x290xbf16> to vector<8x256xbf16>
    %143 = vector.extract_strided_slice %92 {offsets = [0, 34], sizes = [8, 256], strides = [1, 1]} : vector<8x290xbf16> to vector<8x256xbf16>
    %cst_42 = arith.constant 0.000000e+00 : bf16
    %144 = vector.broadcast %cst_42 : bf16 to vector<8x256xbf16>
    %145 = vector.shape_cast %114 : vector<1x256xi1> to vector<1x256xi1>
    %146 = vector.broadcast %145 : vector<1x256xi1> to vector<8x256xi1>
    %147 = arith.select %146, %143, %144 : vector<8x256xi1>, vector<8x256xbf16>
    %148 = tpu.concatenate %119, %120, %125, %130, %131, %136, %141, %142, %147 in 0 : vector<8x256xbf16>, vector<8x256xbf16>, vector<8x256xbf16>, vector<8x256xbf16>, vector<8x256xbf16>, vector<8x256xbf16>, vector<8x256xbf16>, vector<8x256xbf16>, vector<8x256xbf16> -> vector<72x256xbf16>
    %cst_43 = arith.constant dense<0.000000e+00> : vector<8x256xf32>
    %149 = tpu.matmul %93, %148, %cst_43 {dimension_numbers = #tpu.dot_dimension_numbers<[1], [0], [0], [1], [0, 0, 1, 1], [], []>} : vector<8x72xbf16>, vector<72x256xbf16>, vector<8x256xf32> -> vector<8x256xf32>
    %c0_44 = arith.constant 0 : index
    %c0_45 = arith.constant 0 : index
    %150 = vector.load %arg8[%c0_44, %c0_45] : memref<8x1xf32, #tpu.memory_space<vmem>>, vector<8x1xf32>
    %151 = vector.broadcast %150 : vector<8x1xf32> to vector<8x256xf32>
    %152 = arith.addf %149, %151 : vector<8x256xf32>
    %cst_46 = arith.constant 1.000000e-01 : f32
    %153 = vector.broadcast %cst_46 : f32 to vector<8x256xf32>
    %154 = arith.mulf %153, %152 : vector<8x256xf32>
    %155 = arith.maximumf %152, %154 : vector<8x256xf32>
    %c0_47 = arith.constant 0 : index
    %c0_48 = arith.constant 0 : index
    %156 = vector.load %arg9[%c0_47, %c0_48] : memref<8x4xbf16, #tpu.memory_space<vmem>>, vector<8x4xbf16>
    %157 = arith.truncf %7 : vector<4x256xf32> to vector<4x256xbf16>
    %cst_49 = arith.constant dense<0.000000e+00> : vector<8x256xf32>
    %158 = tpu.matmul %156, %157, %cst_49 {dimension_numbers = #tpu.dot_dimension_numbers<[1], [0], [0], [1], [0, 0, 1, 1], [], []>} : vector<8x4xbf16>, vector<4x256xbf16>, vector<8x256xf32> -> vector<8x256xf32>
    %c0_50 = arith.constant 0 : index
    %c0_51 = arith.constant 0 : index
    %159 = vector.load %arg10[%c0_50, %c0_51] : memref<8x1xf32, #tpu.memory_space<vmem>>, vector<8x1xf32>
    %160 = vector.broadcast %159 : vector<8x1xf32> to vector<8x256xf32>
    %161 = arith.addf %158, %160 : vector<8x256xf32>
    %162 = arith.addf %155, %161 : vector<8x256xf32>
    %c0_52 = arith.constant 0 : index
    %c0_53 = arith.constant 0 : index
    %c0_54 = arith.constant 0 : index
    %163 = vector.load %arg11[%c0_52, %c0_53, %c0_54] : memref<1x8x256xf32, #tpu.memory_space<vmem>>, vector<1x8x256xf32>
    %164 = vector.shape_cast %163 : vector<1x8x256xf32> to vector<8x256xf32>
    %165 = vector.shape_cast %162 : vector<8x256xf32> to vector<1x8x256xf32>
    tpu.vector_store %arg11[%c0_52, %c0_53, %c0_54], %165 {strides = array<i32>} : memref<1x8x256xf32, #tpu.memory_space<vmem>>, vector<1x8x256xf32>,
    return
  }
  func.func @transform_0(%arg0: i32, %arg1: i32) -> (i32, i32, i32) {
    %c0_i32 = arith.constant 0 : i32
    %c0_i32_0 = arith.constant 0 : i32
    return %arg0, %c0_i32, %arg1 : i32, i32, i32
  }
  func.func @transform_1(%arg0: i32, %arg1: i32) -> (i32, i32, i32) {
    %c2_i32 = arith.constant 2 : i32
    %0 = arith.muli %arg1, %c2_i32 : i32
    %c1_i32 = arith.constant 1 : i32
    %1 = arith.subi %0, %c1_i32 : i32
    %c0_i32 = arith.constant 0 : i32
    %2 = arith.maxsi %1, %c0_i32 : i32
    %c0_i32_0 = arith.constant 0 : i32
    %c0_i32_1 = arith.constant 0 : i32
    return %arg0, %c0_i32_0, %2 : i32, i32, i32
  }
  func.func @transform_2(%arg0: i32, %arg1: i32) -> (i32, i32, i32) {
    %c1_i32 = arith.constant 1 : i32
    %0 = arith.addi %arg1, %c1_i32 : i32
    %c2_i32 = arith.constant 2 : i32
    %1 = arith.muli %0, %c2_i32 : i32
    %c1_i32_0 = arith.constant 1 : i32
    %2 = arith.minsi %1, %c1_i32_0 : i32
    %c0_i32 = arith.constant 0 : i32
    %c0_i32_1 = arith.constant 0 : i32
    return %arg0, %c0_i32, %2 : i32, i32, i32
  }
  func.func @transform_3(%arg0: i32, %arg1: i32) -> (i32, i32) {
    %c0_i32 = arith.constant 0 : i32
    %c0_i32_0 = arith.constant 0 : i32
    %c0_i32_1 = arith.constant 0 : i32
    return %c0_i32, %c0_i32_0 : i32, i32
  }
  func.func @transform_4(%arg0: i32, %arg1: i32) -> (i32, i32) {
    %c0_i32 = arith.constant 0 : i32
    %c0_i32_0 = arith.constant 0 : i32
    %c0_i32_1 = arith.constant 0 : i32
    return %c0_i32, %c0_i32_0 : i32, i32
  }
  func.func @transform_5(%arg0: i32, %arg1: i32) -> (i32, i32) {
    %c0_i32 = arith.constant 0 : i32
    %c0_i32_0 = arith.constant 0 : i32
    %c0_i32_1 = arith.constant 0 : i32
    return %c0_i32, %c0_i32_0 : i32, i32
  }
  func.func @transform_6(%arg0: i32, %arg1: i32) -> (i32, i32) {
    %c0_i32 = arith.constant 0 : i32
    %c0_i32_0 = arith.constant 0 : i32
    %c0_i32_1 = arith.constant 0 : i32
    return %c0_i32, %c0_i32_0 : i32, i32
  }
  func.func @transform_7(%arg0: i32, %arg1: i32) -> (i32, i32) {
    %c0_i32 = arith.constant 0 : i32
    %c0_i32_0 = arith.constant 0 : i32
    %c0_i32_1 = arith.constant 0 : i32
    return %c0_i32, %c0_i32_0 : i32, i32
  }
  func.func @transform_8(%arg0: i32, %arg1: i32) -> (i32, i32) {
    %c0_i32 = arith.constant 0 : i32
    %c0_i32_0 = arith.constant 0 : i32
    %c0_i32_1 = arith.constant 0 : i32
    return %c0_i32, %c0_i32_0 : i32, i32
  }
  func.func @transform_9(%arg0: i32, %arg1: i32) -> (i32, i32, i32) {
    %c0_i32 = arith.constant 0 : i32
    %c0_i32_0 = arith.constant 0 : i32
    return %arg0, %c0_i32, %arg1 : i32, i32, i32
  }
}

</mosaic_0001>

<llo_original>
// kernel: residual_block_pallas.1
$region0: #{residual_block_pallas.1}
  #allocation0 [shape = 'u32[]', space=smem, size = 0x4, offset = 0x4, fixed_abs, tag = 'smem constant byte address 0x4 - core index']
  #allocation1 [shape = 'u32[144,128]{1,0:T(1,128)}', space=vmem, size = 0x12000, scoped, tag = 'internal scratch']
  %s0 = inlined_call_operand.vmem [shape: f32[2,4,256], index: 0, kind: input, shape index: {}, may-alias: {0,1,2}]
  %s1 = inlined_call_operand.vmem [shape: f32[2,4,256], index: 1, kind: input, shape index: {}, may-alias: {0,1,2}]
  %s2 = inlined_call_operand.vmem [shape: f32[2,4,256], index: 2, kind: input, shape index: {}, may-alias: {0,1,2}]
  %s3 = inlined_call_operand.vmem [shape: bf16[8,36], index: 3, kind: input, shape index: {}]
  %s4 = inlined_call_operand.vmem [shape: f32[8,1], index: 4, kind: input, shape index: {}]
  %s5 = inlined_call_operand.vmem [shape: bf16[8,72], index: 5, kind: input, shape index: {}]
  %s6 = inlined_call_operand.vmem [shape: f32[8,1], index: 6, kind: input, shape index: {}]
  %s7 = inlined_call_operand.vmem [shape: bf16[8,4], index: 7, kind: input, shape index: {}]
  %s8 = inlined_call_operand.vmem [shape: f32[8,1], index: 8, kind: input, shape index: {}]
  %s9 = inlined_call_operand.vmem [shape: f32[2,8,256], index: 9, kind: output, shape index: {}]
  %s10 = sld [smem:[#allocation0]]
  $region69: #{residual_block_pallas.1} parent=0
    _
  %s12 = ssub.s32 1, %s10
  %s13 = scalar_select 0, %s12, %s10
  loop: start=0, step=1, limit=4
  $region2: #{residual_block_pallas.1} parent=0 // loop_pre_header
    _
  $region3: #{residual_block_pallas.1} parent=0 // loop_header
    %s15 = sphi 0, %s19
    %p16 = scmp.ge.s32.totalorder %s15, 4
    %s22 = sphi 0, %s34
    %s23 = sphi 0, %s30
    %s24 = sphi 0, %s22
    %s25 = sphi 0, %s23
    %s26 = sphi 0, %s24
    %s27 = sphi 0, %s25
    %s39 = sphi 0, %s41
    %s42 = sphi 0, %s39
    %s43 = sphi 0, %s42
    %s59 = sphi 0, %s43
    %s75 = sphi 0, %s77
    %s78 = sphi 0, %s75
    %s79 = sphi 0, %s78
    %s95 = sphi 0, %s79
    %s111 = sphi 0, %s113
    %s114 = sphi 0, %s111
    %s115 = sphi 0, %s114
    %s131 = sphi 0, %s115
    %s135 = sphi 0, %s135
    %s137 = sphi 0, %s135
    %s138 = sphi 0, %s137
    %s152 = sphi 0, %s138
    %s156 = sphi 0, %s156
    %s158 = sphi 0, %s156
    %s159 = sphi 0, %s158
    %s173 = sphi 0, %s159
    %s177 = sphi 0, %s177
    %s179 = sphi 0, %s177
    %s180 = sphi 0, %s179
    %s194 = sphi 0, %s180
    %s198 = sphi 0, %s198
    %s200 = sphi 0, %s198
    %s201 = sphi 0, %s200
    %s215 = sphi 0, %s201
    %s219 = sphi 0, %s219
    %s221 = sphi 0, %s219
    %s222 = sphi 0, %s221
    %s236 = sphi 0, %s222
    %s240 = sphi 0, %s240
    %s242 = sphi 0, %s240
    %s243 = sphi 0, %s242
    %s257 = sphi 0, %s243
    %s265 = sphi 0, %s267
    %s268 = sphi 0, %s265
    %s269 = sphi 0, %s268
    %s285 = sphi 0, %s269
  $region4: #{residual_block_pallas.1} parent=0 // loop_header_branch
    %18 = sbr.rel (%p16) target = $region8
  $region5: #{residual_block_pallas.1} parent=0 // loop_body
    %s20 = ssub.s32 %s15, 1
    %s21 = ssub.s32 %s15, 2
    %s28 = sadd.s32 1, %s23
    %p29 = scmp.ge.s32.totalorder %s28, 1
    %s30 = scalar_select %p29, 0, %s28
    %s31 = sadd.s32 1, %s22
    %s32 = scalar_select %p29, %s31, %s22
    %p33 = scmp.ge.s32.totalorder %s32, 2
    %s34 = scalar_select %p33, 0, %s32
    %s35 = ssub.s32 %s22, %s34
    %s36 = ssub.s32 %s23, %s30
    %s37 = sor.u32 %s35, %s36
    %p38 = scmp.eq.s32.totalorder %s37, 0
    %s40 = sadd.s32 %s39, 1
    %s41 = scalar_select %p38, %s39, %s40
    %p44 = pneg %p38
    %p45 = scmp.eq.s32.totalorder %s15, 1
    %p46 = por %p44, %p45
    %p47 = scmp.ne.s32.totalorder %s39, %s42
    %p48 = scmp.eq.s32.totalorder %s15, 0
    %p49 = por %p47, %p48
    %p50 = scmp.ne.s32.totalorder %s39, %s42
    %p51 = scmp.eq.s32.totalorder %s20, 1
    %p52 = por %p50, %p51
    %p53 = scmp.ne.s32.totalorder %s42, %s43
    %p54 = scmp.eq.s32.totalorder %s20, 0
    %p55 = por %p53, %p54
    %p56 = scmp.ne.s32.totalorder %s42, %s43
    %p57 = scmp.eq.s32.totalorder %s21, 1
    %p58 = por %p56, %p57
    %p60 = scmp.ne.s32.totalorder %s43, %s59
    %p61 = scmp.eq.s32.totalorder %s21, 0
    %p62 = por %p60, %p61
    %s63 = smul.u32 %s23, 2
    %s64 = ssub.s32 %s63, 1
    %p65 = scmp.gt.s32.totalorder %s64, 0
    %s66 = scalar_select %p65, %s64, 0
    %s67 = smul.u32 %s30, 2
    %s68 = ssub.s32 %s67, 1
    %p69 = scmp.gt.s32.totalorder %s68, 0
    %s70 = scalar_select %p69, %s68, 0
    %s71 = ssub.s32 %s22, %s34
    %s72 = ssub.s32 %s66, %s70
    %s73 = sor.u32 %s71, %s72
    %p74 = scmp.eq.s32.totalorder %s73, 0
    %s76 = sadd.s32 %s75, 1
    %s77 = scalar_select %p74, %s75, %s76
    %p80 = pneg %p74
    %p81 = scmp.eq.s32.totalorder %s15, 1
    %p82 = por %p80, %p81
    %p83 = scmp.ne.s32.totalorder %s75, %s78
    %p84 = scmp.eq.s32.totalorder %s15, 0
    %p85 = por %p83, %p84
    %p86 = scmp.ne.s32.totalorder %s75, %s78
    %p87 = scmp.eq.s32.totalorder %s20, 1
    %p88 = por %p86, %p87
    %p89 = scmp.ne.s32.totalorder %s78, %s79
    %p90 = scmp.eq.s32.totalorder %s20, 0
    %p91 = por %p89, %p90
    %p92 = scmp.ne.s32.totalorder %s78, %s79
    %p93 = scmp.eq.s32.totalorder %s21, 1
    %p94 = por %p92, %p93
    %p96 = scmp.ne.s32.totalorder %s79, %s95
    %p97 = scmp.eq.s32.totalorder %s21, 0
    %p98 = por %p96, %p97
    %s99 = sadd.s32 %s23, 1
    %s100 = smul.u32 %s99, 2
    %p101 = scmp.lt.s32.totalorder %s100, 1
    %s102 = scalar_select %p101, %s100, 1
    %s103 = sadd.s32 %s30, 1
    %s104 = smul.u32 %s103, 2
    %p105 = scmp.lt.s32.totalorder %s104, 1
    %s106 = scalar_select %p105, %s104, 1
    %s107 = ssub.s32 %s22, %s34
    %s108 = ssub.s32 %s102, %s106
    %s109 = sor.u32 %s107, %s108
    %p110 = scmp.eq.s32.totalorder %s109, 0
    %s112 = sadd.s32 %s111, 1
    %s113 = scalar_select %p110, %s111, %s112
    %p116 = pneg %p110
    %p117 = scmp.eq.s32.totalorder %s15, 1
    %p118 = por %p116, %p117
    %p119 = scmp.ne.s32.totalorder %s111, %s114
    %p120 = scmp.eq.s32.totalorder %s15, 0
    %p121 = por %p119, %p120
    %p122 = scmp.ne.s32.totalorder %s111, %s114
    %p123 = scmp.eq.s32.totalorder %s20, 1
    %p124 = por %p122, %p123
    %p125 = scmp.ne.s32.totalorder %s114, %s115
    %p126 = scmp.eq.s32.totalorder %s20, 0
    %p127 = por %p125, %p126
    %p128 = scmp.ne.s32.totalorder %s114, %s115
    %p129 = scmp.eq.s32.totalorder %s21, 1
    %p130 = por %p128, %p129
    %p132 = scmp.ne.s32.totalorder %s115, %s131
    %p133 = scmp.eq.s32.totalorder %s21, 0
    %p134 = por %p132, %p133
    %s136 = sadd.s32 %s135, 1
    %p139 = scmp.eq.s32.totalorder %s15, 1
    %p140 = scmp.ne.s32.totalorder %s135, %s137
    %p141 = scmp.eq.s32.totalorder %s15, 0
    %p142 = por %p140, %p141
    %p143 = scmp.ne.s32.totalorder %s135, %s137
    %p144 = scmp.eq.s32.totalorder %s20, 1
    %p145 = por %p143, %p144
    %p146 = scmp.ne.s32.totalorder %s137, %s138
    %p147 = scmp.eq.s32.totalorder %s20, 0
    %p148 = por %p146, %p147
    %p149 = scmp.ne.s32.totalorder %s137, %s138
    %p150 = scmp.eq.s32.totalorder %s21, 1
    %p151 = por %p149, %p150
    %p153 = scmp.ne.s32.totalorder %s138, %s152
    %p154 = scmp.eq.s32.totalorder %s21, 0
    %p155 = por %p153, %p154
    %s157 = sadd.s32 %s156, 1
    %p160 = scmp.eq.s32.totalorder %s15, 1
    %p161 = scmp.ne.s32.totalorder %s156, %s158
    %p162 = scmp.eq.s32.totalorder %s15, 0
    %p163 = por %p161, %p162
    %p164 = scmp.ne.s32.totalorder %s156, %s158
    %p165 = scmp.eq.s32.totalorder %s20, 1
    %p166 = por %p164, %p165
    %p167 = scmp.ne.s32.totalorder %s158, %s159
    %p168 = scmp.eq.s32.totalorder %s20, 0
    %p169 = por %p167, %p168
    %p170 = scmp.ne.s32.totalorder %s158, %s159
    %p171 = scmp.eq.s32.totalorder %s21, 1
    %p172 = por %p170, %p171
    %p174 = scmp.ne.s32.totalorder %s159, %s173
    %p175 = scmp.eq.s32.totalorder %s21, 0
    %p176 = por %p174, %p175
    %s178 = sadd.s32 %s177, 1
    %p181 = scmp.eq.s32.totalorder %s15, 1
    %p182 = scmp.ne.s32.totalorder %s177, %s179
    %p183 = scmp.eq.s32.totalorder %s15, 0
    %p184 = por %p182, %p183
    %p185 = scmp.ne.s32.totalorder %s177, %s179
    %p186 = scmp.eq.s32.totalorder %s20, 1
    %p187 = por %p185, %p186
    %p188 = scmp.ne.s32.totalorder %s179, %s180
    %p189 = scmp.eq.s32.totalorder %s20, 0
    %p190 = por %p188, %p189
    %p191 = scmp.ne.s32.totalorder %s179, %s180
    %p192 = scmp.eq.s32.totalorder %s21, 1
    %p193 = por %p191, %p192
    %p195 = scmp.ne.s32.totalorder %s180, %s194
    %p196 = scmp.eq.s32.totalorder %s21, 0
    %p197 = por %p195, %p196
    %s199 = sadd.s32 %s198, 1
    %p202 = scmp.eq.s32.totalorder %s15, 1
    %p203 = scmp.ne.s32.totalorder %s198, %s200
    %p204 = scmp.eq.s32.totalorder %s15, 0
    %p205 = por %p203, %p204
    %p206 = scmp.ne.s32.totalorder %s198, %s200
    %p207 = scmp.eq.s32.totalorder %s20, 1
    %p208 = por %p206, %p207
    %p209 = scmp.ne.s32.totalorder %s200, %s201
    %p210 = scmp.eq.s32.totalorder %s20, 0
    %p211 = por %p209, %p210
    %p212 = scmp.ne.s32.totalorder %s200, %s201
    %p213 = scmp.eq.s32.totalorder %s21, 1
    %p214 = por %p212, %p213
    %p216 = scmp.ne.s32.totalorder %s201, %s215
    %p217 = scmp.eq.s32.totalorder %s21, 0
    %p218 = por %p216, %p217
    %s220 = sadd.s32 %s219, 1
    %p223 = scmp.eq.s32.totalorder %s15, 1
    %p224 = scmp.ne.s32.totalorder %s219, %s221
    %p225 = scmp.eq.s32.totalorder %s15, 0
    %p226 = por %p224, %p225
    %p227 = scmp.ne.s32.totalorder %s219, %s221
    %p228 = scmp.eq.s32.totalorder %s20, 1
    %p229 = por %p227, %p228
    %p230 = scmp.ne.s32.totalorder %s221, %s222
    %p231 = scmp.eq.s32.totalorder %s20, 0
    %p232 = por %p230, %p231
    %p233 = scmp.ne.s32.totalorder %s221, %s222
    %p234 = scmp.eq.s32.totalorder %s21, 1
    %p235 = por %p233, %p234
    %p237 = scmp.ne.s32.totalorder %s222, %s236
    %p238 = scmp.eq.s32.totalorder %s21, 0
    %p239 = por %p237, %p238
    %s241 = sadd.s32 %s240, 1
    %p244 = scmp.eq.s32.totalorder %s15, 1
    %p245 = scmp.ne.s32.totalorder %s240, %s242
    %p246 = scmp.eq.s32.totalorder %s15, 0
    %p247 = por %p245, %p246
    %p248 = scmp.ne.s32.totalorder %s240, %s242
    %p249 = scmp.eq.s32.totalorder %s20, 1
    %p250 = por %p248, %p249
    %p251 = scmp.ne.s32.totalorder %s242, %s243
    %p252 = scmp.eq.s32.totalorder %s20, 0
    %p253 = por %p251, %p252
    %p254 = scmp.ne.s32.totalorder %s242, %s243
    %p255 = scmp.eq.s32.totalorder %s21, 1
    %p256 = por %p254, %p255
    %p258 = scmp.ne.s32.totalorder %s243, %s257
    %p259 = scmp.eq.s32.totalorder %s21, 0
    %p260 = por %p258, %p259
    %s261 = ssub.s32 %s22, %s34
    %s262 = ssub.s32 %s23, %s30
    %s263 = sor.u32 %s261, %s262
    %p264 = scmp.eq.s32.totalorder %s263, 0
    %s266 = sadd.s32 %s265, 1
    %s267 = scalar_select %p264, %s265, %s266
    %p270 = pneg %p264
    %p271 = scmp.eq.s32.totalorder %s15, 1
    %p272 = por %p270, %p271
    %p273 = scmp.ne.s32.totalorder %s265, %s268
    %p274 = scmp.eq.s32.totalorder %s15, 0
    %p275 = por %p273, %p274
    %p276 = scmp.ne.s32.totalorder %s265, %s268
    %p277 = scmp.eq.s32.totalorder %s20, 1
    %p278 = por %p276, %p277
    %p279 = scmp.ne.s32.totalorder %s268, %s269
    %p280 = scmp.eq.s32.totalorder %s20, 0
    %p281 = por %p279, %p280
    %p282 = scmp.ne.s32.totalorder %s268, %s269
    %p283 = scmp.eq.s32.totalorder %s21, 1
    %p284 = por %p282, %p283
    %p286 = scmp.ne.s32.totalorder %s269, %s285
    %p287 = scmp.eq.s32.totalorder %s21, 0
    %p288 = por %p286, %p287
    %p289 = scmp.le.s32.totalorder 1, %s15
    %p290 = scmp.lt.s32.totalorder %s15, 3
    %p291 = pnand %p289, %p290
    %p292 = pneg %p291
    // Predicated region
    $region9: #{residual_block_pallas.1} parent=5 // pred_check
      _
    $region10: #{residual_block_pallas.1} parent=5 // pred_check_branch
      %294 = sbr.rel (%p291) target = $region12
    $region11: #{residual_block_pallas.1} parent=5 // pred_region
      %s295 = ssub.s32 %s15, 1
      // Predicated region
      $region13: #{residual_block_pallas.1} parent=11 // pred_check
        %p296 = pneg %p148
      $region14: #{residual_block_pallas.1} parent=11 // pred_check_branch
        %298 = sbr.rel (%p296) target = $region16
      $region15: #{residual_block_pallas.1} parent=11 // pred_region
        _
      $region16: #{residual_block_pallas.1} parent=11 // pred_fallthru
        _
      // Predicated region
      $region17: #{residual_block_pallas.1} parent=11 // pred_check
        %p299 = pneg %p169
      $region18: #{residual_block_pallas.1} parent=11 // pred_check_branch
        %301 = sbr.rel (%p299) target = $region20
      $region19: #{residual_block_pallas.1} parent=11 // pred_region
        _
      $region20: #{residual_block_pallas.1} parent=11 // pred_fallthru
        _
      // Predicated region
      $region21: #{residual_block_pallas.1} parent=11 // pred_check
        %p302 = pneg %p190
      $region22: #{residual_block_pallas.1} parent=11 // pred_check_branch
        %304 = sbr.rel (%p302) target = $region24
      $region23: #{residual_block_pallas.1} parent=11 // pred_region
        _
      $region24: #{residual_block_pallas.1} parent=11 // pred_fallthru
        _
      // Predicated region
      $region25: #{residual_block_pallas.1} parent=11 // pred_check
        %p305 = pneg %p211
      $region26: #{residual_block_pallas.1} parent=11 // pred_check_branch
        %307 = sbr.rel (%p305) target = $region28
      $region27: #{residual_block_pallas.1} parent=11 // pred_region
        _
      $region28: #{residual_block_pallas.1} parent=11 // pred_fallthru
        _
      // Predicated region
      $region29: #{residual_block_pallas.1} parent=11 // pred_check
        %p308 = pneg %p232
      $region30: #{residual_block_pallas.1} parent=11 // pred_check_branch
        %310 = sbr.rel (%p308) target = $region32
      $region31: #{residual_block_pallas.1} parent=11 // pred_region
        _
      $region32: #{residual_block_pallas.1} parent=11 // pred_fallthru
        _
      // Predicated region
      $region33: #{residual_block_pallas.1} parent=11 // pred_check
        %p311 = pneg %p253
      $region34: #{residual_block_pallas.1} parent=11 // pred_check_branch
        %313 = sbr.rel (%p311) target = $region36
      $region35: #{residual_block_pallas.1} parent=11 // pred_region
        _
      $region36: #{residual_block_pallas.1} parent=11 // pred_fallthru
        _
    $region12: #{residual_block_pallas.1} parent=5 // pred_fallthru
      _
    %p314 = scmp.lt.s32.totalorder %s15, 2
    // Predicated region
    $region37: #{residual_block_pallas.1} parent=5 // pred_check
      %p315 = pneg %p314
    $region38: #{residual_block_pallas.1} parent=5 // pred_check_branch
      %317 = sbr.rel (%p315) target = $region40
    $region39: #{residual_block_pallas.1} parent=5 // pred_region
      // Predicated region
      $region41: #{residual_block_pallas.1} parent=39 // pred_check
        %p318 = pneg %p49
      $region42: #{residual_block_pallas.1} parent=39 // pred_check_branch
        %320 = sbr.rel (%p318) target = $region44
      $region43: #{residual_block_pallas.1} parent=39 // pred_region
        %s321 = smul.u32 2, %s23
        %p322 = scmp.lt.s32.totalorder %s22, 1
        %s323 = scalar_select %p322, %s22, 1
        %p324 = scmp.lt.s32.totalorder %s321, 1
        %s325 = scalar_select %p324, %s321, 1
        %s326 = smul.addr %s323, 2
        %s327 = sadd.s32 %s325, %s326
        %s328 = smul.addr %s327, 4
        %s329 = scalar_lea.vmem %s0, %s328
        %s330 = smul.u32 2, %s23
      $region44: #{residual_block_pallas.1} parent=39 // pred_fallthru
        _
      // Predicated region
      $region45: #{residual_block_pallas.1} parent=39 // pred_check
        %p331 = pneg %p85
      $region46: #{residual_block_pallas.1} parent=39 // pred_check_branch
        %333 = sbr.rel (%p331) target = $region48
      $region47: #{residual_block_pallas.1} parent=39 // pred_region
        %s334 = smul.u32 %s23, 2
        %s335 = ssub.s32 %s334, 1
        %p336 = scmp.gt.s32.totalorder %s335, 0
        %s337 = scalar_select %p336, %s335, 0
        %p338 = scmp.lt.s32.totalorder %s22, 1
        %s339 = scalar_select %p338, %s22, 1
        %p340 = scmp.lt.s32.totalorder %s337, 1
        %s341 = scalar_select %p340, %s337, 1
        %s342 = smul.addr %s339, 2
        %s343 = sadd.s32 %s341, %s342
        %s344 = smul.addr %s343, 4
        %s345 = scalar_lea.vmem %s1, %s344
        %s346 = smul.u32 %s23, 2
        %s347 = ssub.s32 %s346, 1
        %p348 = scmp.gt.s32.totalorder %s347, 0
        %s349 = scalar_select %p348, %s347, 0
      $region48: #{residual_block_pallas.1} parent=39 // pred_fallthru
        _
      // Predicated region
      $region49: #{residual_block_pallas.1} parent=39 // pred_check
        %p350 = pneg %p121
      $region50: #{residual_block_pallas.1} parent=39 // pred_check_branch
        %352 = sbr.rel (%p350) target = $region52
      $region51: #{residual_block_pallas.1} parent=39 // pred_region
        %s353 = sadd.s32 %s23, 1
        %s354 = smul.u32 %s353, 2
        %p355 = scmp.lt.s32.totalorder %s354, 1
        %s356 = scalar_select %p355, %s354, 1
        %p357 = scmp.lt.s32.totalorder %s22, 1
        %s358 = scalar_select %p357, %s22, 1
        %p359 = scmp.lt.s32.totalorder %s356, 1
        %s360 = scalar_select %p359, %s356, 1
        %s361 = smul.addr %s358, 2
        %s362 = sadd.s32 %s360, %s361
        %s363 = smul.addr %s362, 4
        %s364 = scalar_lea.vmem %s2, %s363
        %s365 = sadd.s32 %s23, 1
        %s366 = smul.u32 %s365, 2
        %p367 = scmp.lt.s32.totalorder %s366, 1
        %s368 = scalar_select %p367, %s366, 1
      $region52: #{residual_block_pallas.1} parent=39 // pred_fallthru
        _
    $region40: #{residual_block_pallas.1} parent=5 // pred_fallthru
      _
    %p369 = scmp.le.s32.totalorder 1, %s15
    %p370 = scmp.lt.s32.totalorder %s15, 3
    %p371 = pnand %p369, %p370
    %p372 = pneg %p371
    // Predicated region
    $region53: #{residual_block_pallas.1} parent=5 // pred_check
      _
    $region54: #{residual_block_pallas.1} parent=5 // pred_check_branch
      %374 = sbr.rel (%p371) target = $region56
    $region55: #{residual_block_pallas.1} parent=5 // pred_region
      %s375 = ssub.s32 %s15, 1
      %s376 = smul.u32 2, %s25
      %p377 = scmp.lt.s32.totalorder %s24, 1
      %s378 = scalar_select %p377, %s24, 1
      %p379 = scmp.lt.s32.totalorder %s376, 1
      %s380 = scalar_select %p379, %s376, 1
      %s381 = smul.addr %s378, 2
      %s382 = sadd.s32 %s380, %s381
      %s383 = smul.addr %s382, 4
      %s384 = scalar_lea.vmem %s0, %s383
      %p385 = pneg %p55
      %p386 = pneg %p52
      %s387 = smul.u32 %s25, 2
      %s388 = ssub.s32 %s387, 1
      %p389 = scmp.gt.s32.totalorder %s388, 0
      %s390 = scalar_select %p389, %s388, 0
      %p391 = scmp.lt.s32.totalorder %s24, 1
      %s392 = scalar_select %p391, %s24, 1
      %p393 = scmp.lt.s32.totalorder %s390, 1
      %s394 = scalar_select %p393, %s390, 1
      %s395 = smul.addr %s392, 2
      %s396 = sadd.s32 %s394, %s395
      %s397 = smul.addr %s396, 4
      %s398 = scalar_lea.vmem %s1, %s397
      %p399 = pneg %p91
      %p400 = pneg %p88
      %s401 = sadd.s32 %s25, 1
      %s402 = smul.u32 %s401, 2
      %p403 = scmp.lt.s32.totalorder %s402, 1
      %s404 = scalar_select %p403, %s402, 1
      %p405 = scmp.lt.s32.totalorder %s24, 1
      %s406 = scalar_select %p405, %s24, 1
      %p407 = scmp.lt.s32.totalorder %s404, 1
      %s408 = scalar_select %p407, %s404, 1
      %s409 = smul.addr %s406, 2
      %s410 = sadd.s32 %s408, %s409
      %s411 = smul.addr %s410, 4
      %s412 = scalar_lea.vmem %s2, %s411
      %p413 = pneg %p127
      %p414 = pneg %p124
      %p415 = pneg %p148
      %p416 = pneg %p145
      %p417 = pneg %p169
      %p418 = pneg %p166
      %p419 = pneg %p190
      %p420 = pneg %p187
      %p421 = pneg %p211
      %p422 = pneg %p208
      %p423 = pneg %p232
      %p424 = pneg %p229
      %p425 = pneg %p253
      %p426 = pneg %p250
      %p427 = pneg %p281
      %p428 = pneg %p278
      %s429 = smul.u32 2, %s25
      %p430 = scmp.lt.s32.totalorder %s24, 1
      %s431 = scalar_select %p430, %s24, 1
      %p432 = scmp.lt.s32.totalorder %s429, 1
      %s433 = scalar_select %p432, %s429, 1
      %s434 = smul.addr %s431, 2
      %s435 = sadd.s32 %s433, %s434
      %s436 = smul.addr %s435, 8
      %s437 = scalar_lea.vmem %s9, %s436
      %s438 = smul.u32 2, %s25
      %p439 = scmp.lt.s32.totalorder %s24, 1
      %s440 = scalar_select %p439, %s24, 1
      %p441 = scmp.lt.s32.totalorder %s438, 1
      %s442 = scalar_select %p441, %s438, 1
      %s443 = smul.addr %s440, 2
      %s444 = sadd.s32 %s442, %s443
      %s445 = smul.addr %s444, 4
      %s446 = scalar_lea.vmem %s0, %s445
      %s447 = smul.u32 2, %s25
      %s448 = smul.u32 %s25, 2
      %s449 = ssub.s32 %s448, 1
      %p450 = scmp.gt.s32.totalorder %s449, 0
      %s451 = scalar_select %p450, %s449, 0
      %p452 = scmp.lt.s32.totalorder %s24, 1
      %s453 = scalar_select %p452, %s24, 1
      %p454 = scmp.lt.s32.totalorder %s451, 1
      %s455 = scalar_select %p454, %s451, 1
      %s456 = smul.addr %s453, 2
      %s457 = sadd.s32 %s455, %s456
      %s458 = smul.addr %s457, 4
      %s459 = scalar_lea.vmem %s1, %s458
      %s460 = smul.u32 %s25, 2
      %s461 = ssub.s32 %s460, 1
      %p462 = scmp.gt.s32.totalorder %s461, 0
      %s463 = scalar_select %p462, %s461, 0
      %s464 = sadd.s32 %s25, 1
      %s465 = smul.u32 %s464, 2
      %p466 = scmp.lt.s32.totalorder %s465, 1
      %s467 = scalar_select %p466, %s465, 1
      %p468 = scmp.lt.s32.totalorder %s24, 1
      %s469 = scalar_select %p468, %s24, 1
      %p470 = scmp.lt.s32.totalorder %s467, 1
      %s471 = scalar_select %p470, %s467, 1
      %s472 = smul.addr %s469, 2
      %s473 = sadd.s32 %s471, %s472
      %s474 = smul.addr %s473, 4
      %s475 = scalar_lea.vmem %s2, %s474
      %s476 = sadd.s32 %s25, 1
      %s477 = smul.u32 %s476, 2
      %p478 = scmp.lt.s32.totalorder %s477, 1
      %s479 = scalar_select %p478, %s477, 1
      %s480 = smul.u32 2, %s25
      %p481 = scmp.lt.s32.totalorder %s24, 1
      %s482 = scalar_select %p481, %s24, 1
      %p483 = scmp.lt.s32.totalorder %s480, 1
      %s484 = scalar_select %p483, %s480, 1
      %s485 = smul.addr %s482, 2
      %s486 = sadd.s32 %s484, %s485
      %s487 = smul.addr %s486, 8
      %s488 = scalar_lea.vmem %s9, %s487
      %s489 = smul.u32 2, %s25
      %p493 = scmp.gt.s32.totalorder %s25, 0
      %s494 = scalar_select %p493, 1, 0
      %s495 = scvt.s32.f32 %s494
      %p496 = scmp.lt.s32.totalorder %s25, 0
      %s497 = scalar_select %p496, 1, 0
      %s498 = scvt.s32.f32 %s497
      %v499 = vld [vmem:[%s446] sm:$0xff]
      %v500 = vld [vmem:[%s459] sm:$0xf]
      %v501 = vstv %s495
      %v502 = vmul.f32 %v500, %v501
      %v503 = vld [vmem:[%s475] sm:$0xf]
      %v504 = vstv %s498
      %v505 = vmul.f32 %v503, %v504
      %507 = vrot.lane.b32.xlu0 %v502, 33
      %v508 = vpop.permute.xlu0 %507
      %v511 = vcombine.high %v499, %v499
      %512 = vrot.lane.b32.xlu0 %v499, 33
      %v513 = vpop.permute.xlu0 %512
      %514 = vrot.lane.b32.xlu0 %v511, 33
      %v515 = vpop.permute.xlu0 %514
      %vm516 = vcmask 269312
      %v517 = vsel %vm516, %v513, %v515
      %522 = vrot.lane.b32.xlu0 %v505, 33
      %v523 = vpop.permute.xlu0 %522
      %vm525 = vcmask 7168
      %v526 = vsel %vm525, 0.0, %v508
      %v527 = vsel %vm516, %v526, %v513
      %v528 = vsel %vm516, %v515, %v523
      %vm529 = vcmask 531456
      %v530 = vsel %vm529, %v528, 0.0
      %v531 = vpack.c.bf16 %v527, %v527
      %v532 = vpack.c.bf16 %v517, %v517
      %v533 = vpack.c.bf16 %v530, %v530
      %v534 = vld [vmem:[%s3] sm:$0xf]
      %v535 = vlaneseq
      %v536 = vand.u32 %v535, 127
      %v537 = vadd.s32 %v536, 128
      %v538 = vadd.s32 %v536, 256
      %vm539 = vcmp.lt.s32.totalorder %v536, 0
      %v540 = vsub.s32 0, %v536
      %v541 = vsel %vm539, %v540, %v536
      %v542 = vshrl.u32 %v541, 4
      %v543 = vand.u32 %v541, 15
      %v544 = vsub.s32 0, %v543
      %v545 = vsel %vm539, %v544, %v543
      %vm546 = vcmp.lt.s32.totalorder %v537, 0
      %v547 = vsub.s32 0, %v537
      %v548 = vsel %vm546, %v547, %v537
      %v549 = vshrl.u32 %v548, 4
      %v550 = vand.u32 %v548, 15
      %v551 = vsub.s32 0, %v550
      %v552 = vsel %vm546, %v551, %v550
      %vm553 = vcmp.lt.s32.totalorder %v538, 0
      %v554 = vsub.s32 0, %v538
      %v555 = vsel %vm553, %v554, %v538
      %v556 = vshrl.u32 %v555, 4
      %v557 = vand.u32 %v555, 15
      %v558 = vsub.s32 0, %v557
      %v559 = vsel %vm553, %v558, %v557
      %vm560 = vcmp.ne.s32.totalorder %v545, 0
      %vm561 = vcmp.ne.s32.totalorder %v552, 0
      %vm562 = vcmp.ne.s32.totalorder %v559, 0
      %vm563 = vcmp.lt.s32.totalorder %v545, 0
      %vm564 = vcmp.lt.s32.totalorder %v552, 0
      %vm565 = vcmp.lt.s32.totalorder %v559, 0
      %vm566 = vmand %vm563, %vm560
      %vm567 = vmand %vm564, %vm561
      %vm568 = vmand %vm565, %vm562
      %v569 = vadd.s32 %v545, 16
      %v570 = vadd.s32 %v552, 16
      %v571 = vadd.s32 %v559, 16
      %v572 = vsel %vm566, %v569, %v545
      %v573 = vsel %vm567, %v570, %v552
      %v574 = vsel %vm568, %v571, %v559
      %vm575 = vcmp.ne.s32.totalorder %v572, 0
      %vm576 = vcmp.ne.s32.totalorder %v573, 0
      %vm577 = vcmp.ne.s32.totalorder %v574, 0
      %vm578 = vcmp.ne.s32.totalorder %v572, 15
      %vm579 = vcmp.ne.s32.totalorder %v573, 15
      %vm580 = vcmp.ne.s32.totalorder %v574, 15
      %v581 = vsel %vm575, 1, 0
      %v582 = vsel %vm576, 1, 0
      %v583 = vsel %vm577, 1, 0
      %vm584 = vcmp.eq.s32.totalorder %v581, 1
      %vm585 = vcmp.eq.s32.totalorder %v582, 1
      %vm586 = vcmp.eq.s32.totalorder %v583, 1
      %vm587 = vmpackc.low %vm585, %vm584
      %vm588 = vmpackc.low %vm586, %vm586
      %v589 = vsel %vm587, 65537, 0
      %v590 = vsel %vm588, 65537, 0
      %v591 = vlaneseq
      %v592 = vshrl.u32 %v591, 7
      %v593 = vsub.s32 0, %v592
      %v594 = vrot.slane %v589, %v593
      %v595 = vlaneseq
      %v596 = vshrl.u32 %v595, 7
      %v597 = vsub.s32 4, %v596
      %v598 = vrot.slane %v589, %v597
      %v599 = vlaneseq
      %v600 = vshrl.u32 %v599, 7
      %v601 = vsub.s32 0, %v600
      %v602 = vrot.slane %v590, %v601
      %vm603 = vcmp.ne.s16.totalorder %v594, 0
      %vm604 = vcmp.ne.s16.totalorder %v598, 0
      %vm605 = vcmp.ne.s16.totalorder %v602, 0
      %v606 = vsel %vm603, %v531, 0
      %v607 = vsel %vm604, %v532, 0
      %v608 = vsel %vm605, %v533, 0
      %v609 = vsel %vm578, 1, 0
      %v610 = vsel %vm579, 1, 0
      %v611 = vsel %vm580, 1, 0
      %vm612 = vcmp.eq.s32.totalorder %v609, 1
      %vm613 = vcmp.eq.s32.totalorder %v610, 1
      %vm614 = vcmp.eq.s32.totalorder %v611, 1
      %vm615 = vmpackc.low %vm613, %vm612
      %vm616 = vmpackc.low %vm614, %vm614
      %v617 = vsel %vm615, 65537, 0
      %v618 = vsel %vm616, 65537, 0
      %v619 = vlaneseq
      %v620 = vshrl.u32 %v619, 7
      %v621 = vsub.s32 0, %v620
      %v622 = vrot.slane %v617, %v621
      %v623 = vlaneseq
      %v624 = vshrl.u32 %v623, 7
      %v625 = vsub.s32 4, %v624
      %v626 = vrot.slane %v617, %v625
      %v627 = vlaneseq
      %v628 = vshrl.u32 %v627, 7
      %v629 = vsub.s32 0, %v628
      %v630 = vrot.slane %v618, %v629
      %631 = vrot.lane.b32.xlu0 %v622, 2
      %v632 = vpop.permute.xlu0 %631
      %633 = vrot.lane.b32.xlu0 %v626, 2
      %v634 = vpop.permute.xlu0 %633
      %635 = vrot.lane.b32.xlu0 %v630, 2
      %v636 = vpop.permute.xlu0 %635
      %vm637 = vcmask 15360
      %v638 = vsel %vm637, %v632, %v634
      %v639 = vsel %vm637, %v634, %v636
      %vm640 = vcmp.ne.s16.totalorder %v632, 0
      %vm641 = vcmp.ne.s16.totalorder %v638, 0
      %vm642 = vcmp.ne.s16.totalorder %v639, 0
      %v643 = vsel %vm640, %v531, 0
      %v644 = vsel %vm641, %v532, 0
      %v645 = vsel %vm642, %v533, 0
      %646 = vrot.lane.b32.xlu0 %v594, 16
      %v647 = vpop.permute.xlu0 %646
      %648 = vrot.lane.b32.xlu0 %v598, 16
      %v649 = vpop.permute.xlu0 %648
      %650 = vrot.lane.b32.xlu0 %v602, 16
      %v651 = vpop.permute.xlu0 %650
      %vm652 = vcmask 130048
      %v653 = vsel %vm652, %v647, %v649
      %v654 = vsel %vm652, %v649, %v651
      %vm655 = vcmp.ne.s16.totalorder %v647, 0
      %vm656 = vcmp.ne.s16.totalorder %v653, 0
      %vm657 = vcmp.ne.s16.totalorder %v654, 0
      %v658 = vsel %vm655, %v531, 0
      %v659 = vsel %vm656, %v532, 0
      %v660 = vsel %vm657, %v533, 0
      %661 = vrot.lane.b32.xlu0 %v622, 18
      %v662 = vpop.permute.xlu0 %661
      %663 = vrot.lane.b32.xlu0 %v626, 18
      %v664 = vpop.permute.xlu0 %663
      %665 = vrot.lane.b32.xlu0 %v630, 18
      %v666 = vpop.permute.xlu0 %665
      %vm667 = vcmask 146432
      %v668 = vsel %vm667, %v662, %v664
      %v669 = vsel %vm667, %v664, %v666
      %vm670 = vcmp.ne.s16.totalorder %v662, 0
      %vm671 = vcmp.ne.s16.totalorder %v668, 0
      %vm672 = vcmp.ne.s16.totalorder %v669, 0
      %v673 = vsel %vm670, %v531, 0
      %v674 = vsel %vm671, %v532, 0
      %v675 = vsel %vm672, %v533, 0
      %676 = vrot.lane.b32.xlu0 %v594, 32
      %v677 = vpop.permute.xlu0 %676
      %678 = vrot.lane.b32.xlu0 %v598, 32
      %v679 = vpop.permute.xlu0 %678
      %680 = vrot.lane.b32.xlu0 %v602, 32
      %v681 = vpop.permute.xlu0 %680
      %vm682 = vcmask 261120
      %v683 = vsel %vm682, %v677, %v679
      %v684 = vsel %vm682, %v679, %v681
      %vm685 = vcmp.ne.s16.totalorder %v677, 0
      %vm686 = vcmp.ne.s16.totalorder %v683, 0
      %vm687 = vcmp.ne.s16.totalorder %v684, 0
      %v688 = vsel %vm685, %v531, 0
      %v689 = vsel %vm686, %v532, 0
      %v690 = vsel %vm687, %v533, 0
      %691 = vrot.lane.b32.xlu0 %v622, 34
      %v692 = vpop.permute.xlu0 %691
      %693 = vrot.lane.b32.xlu0 %v626, 34
      %v694 = vpop.permute.xlu0 %693
      %695 = vrot.lane.b32.xlu0 %v630, 34
      %v696 = vpop.permute.xlu0 %695
      %vm697 = vcmask 277504
      %v698 = vsel %vm697, %v692, %v694
      %v699 = vsel %vm697, %v694, %v696
      %vm700 = vcmp.ne.s16.totalorder %v692, 0
      %vm701 = vcmp.ne.s16.totalorder %v698, 0
      %vm702 = vcmp.ne.s16.totalorder %v699, 0
      %v703 = vsel %vm700, %v531, 0
      %v704 = vsel %vm701, %v532, 0
      %v705 = vsel %vm702, %v533, 0
      %v709 = vrot.slane %v531, 6
      %v710 = vrot.slane %v532, 6
      %v711 = vrot.slane %v533, 6
      %712 = vrot.lane.b32.xlu0 %v709, 127
      %v713 = vpop.permute.xlu0 %712
      %714 = vrot.lane.b32.xlu0 %v710, 127
      %v715 = vpop.permute.xlu0 %714
      %716 = vrot.lane.b32.xlu0 %v711, 127
      %v717 = vpop.permute.xlu0 %716
      %vm718 = vcmask 1039360
      %v719 = vsel %vm718, %v713, %v715
      %v720 = vsel %vm718, %v715, %v717
      %v724 = vrot.slane %v643, 4
      %v725 = vrot.slane %v644, 4
      %v726 = vrot.slane %v645, 4
      %727 = vrot.lane.b32.xlu0 %v724, 126
      %v728 = vpop.permute.xlu0 %727
      %729 = vrot.lane.b32.xlu0 %v725, 126
      %v730 = vpop.permute.xlu0 %729
      %731 = vrot.lane.b32.xlu0 %v726, 126
      %v732 = vpop.permute.xlu0 %731
      %vm733 = vcmask 1031168
      %v734 = vsel %vm733, %v728, %v730
      %v735 = vsel %vm733, %v730, %v732
      %v739 = vrot.slane %v658, 2
      %v740 = vrot.slane %v659, 2
      %v741 = vrot.slane %v660, 2
      %742 = vrot.lane.b32.xlu0 %v739, 112
      %v743 = vpop.permute.xlu0 %742
      %744 = vrot.lane.b32.xlu0 %v740, 112
      %v745 = vpop.permute.xlu0 %744
      %746 = vrot.lane.b32.xlu0 %v741, 112
      %v747 = vpop.permute.xlu0 %746
      %vm748 = vcmask 916480
      %v749 = vsel %vm748, %v743, %v745
      %v750 = vsel %vm748, %v745, %v747
      %751 = vrot.lane.b32.xlu0 %v531, 111
      %v752 = vpop.permute.xlu0 %751
      %753 = vrot.lane.b32.xlu0 %v532, 111
      %v754 = vpop.permute.xlu0 %753
      %755 = vrot.lane.b32.xlu0 %v533, 111
      %v756 = vpop.permute.xlu0 %755
      %vm757 = vcmask 908288
      %v758 = vsel %vm757, %v752, %v754
      %v759 = vsel %vm757, %v754, %v756
      %v763 = vrot.slane %v673, 6
      %v764 = vrot.slane %v674, 6
      %v765 = vrot.slane %v675, 6
      %766 = vrot.lane.b32.xlu0 %v763, 110
      %v767 = vpop.permute.xlu0 %766
      %768 = vrot.lane.b32.xlu0 %v764, 110
      %v769 = vpop.permute.xlu0 %768
      %770 = vrot.lane.b32.xlu0 %v765, 110
      %v771 = vpop.permute.xlu0 %770
      %vm772 = vcmask 900096
      %v773 = vsel %vm772, %v767, %v769
      %v774 = vsel %vm772, %v769, %v771
      %v778 = vrot.slane %v688, 4
      %v779 = vrot.slane %v689, 4
      %v780 = vrot.slane %v690, 4
      %781 = vrot.lane.b32.xlu0 %v778, 96
      %v782 = vpop.permute.xlu0 %781
      %783 = vrot.lane.b32.xlu0 %v779, 96
      %v784 = vpop.permute.xlu0 %783
      %785 = vrot.lane.b32.xlu0 %v780, 96
      %v786 = vpop.permute.xlu0 %785
      %vm787 = vcmask 785408
      %v788 = vsel %vm787, %v782, %v784
      %v789 = vsel %vm787, %v784, %v786
      %v790 = vrot.slane %v531, 2
      %v791 = vrot.slane %v532, 2
      %v792 = vrot.slane %v533, 2
      %793 = vrot.lane.b32.xlu0 %v790, 95
      %v794 = vpop.permute.xlu0 %793
      %795 = vrot.lane.b32.xlu0 %v791, 95
      %v796 = vpop.permute.xlu0 %795
      %797 = vrot.lane.b32.xlu0 %v792, 95
      %v798 = vpop.permute.xlu0 %797
      %vm799 = vcmask 777216
      %v800 = vsel %vm799, %v794, %v796
      %v801 = vsel %vm799, %v796, %v798
      %805 = vrot.lane.b32.xlu0 %v703, 94
      %v806 = vpop.permute.xlu0 %805
      %807 = vrot.lane.b32.xlu0 %v704, 94
      %v808 = vpop.permute.xlu0 %807
      %809 = vrot.lane.b32.xlu0 %v705, 94
      %v810 = vpop.permute.xlu0 %809
      %vm811 = vcmask 769024
      %v812 = vsel %vm811, %v806, %v808
      %v813 = vsel %vm811, %v808, %v810
      %vm814 = vcmask 1041408
      %v817 = vsel %vm814, %v606, %v719
      %v820 = vsel %vm814, %v607, %v720
      %v823 = vsel %vm814, %v608, %v717
      %vm824 = vcmask 1043456
      %v826 = vsel %vm824, %v817, %v734
      %v828 = vsel %vm824, %v820, %v735
      %v830 = vsel %vm824, %v823, %v732
      %vm831 = vcmask 1045504
      %v833 = vsel %vm831, %v826, %v749
      %v836 = vsel %vm831, %v828, %v750
      %v839 = vsel %vm831, %v830, %v747
      %v843 = vsel %vm814, %v758, %v773
      %v846 = vsel %vm814, %v759, %v774
      %v849 = vsel %vm814, %v756, %v771
      %v851 = vsel %vm824, %v843, %v788
      %v853 = vsel %vm824, %v846, %v789
      %v855 = vsel %vm824, %v849, %v786
      %v857 = vsel %vm831, %v851, %v800
      %v860 = vsel %vm831, %v853, %v801
      %v863 = vsel %vm831, %v855, %v798
      %v865 = vld [vmem:[%s4] sm:$0xff]
      %867 = vset.pattern.permute.xlu0 0
      %868 = vperm.xlu0 %867, %v865
      %v869 = vpop.permute.xlu0 %868
      %vm871 = vcmask 293888
      %v873 = vsel %vm871, %v534, 0
      %v876 = vsel %vm814, %v812, 0
      %v879 = vsel %vm814, %v813, 0
      %v882 = vsel %vm814, %v810, 0
      %884 = vmatprep.subr.bf16.mxu0 0
      %885 = vmatpush1.bf16.msra.mxu0 0
      %886 = vmatprep.subr.bf16.mxu0 0
      %887 = vmatpush1.bf16.msra.mxu0 0
      %888 = vmatprep.subr.bf16.mxu0 0
      %889 = vmatpush1.bf16.msra.mxu0 0
      %890 = vmatprep.subr.bf16.mxu0 0
      %891 = vmatpush1.bf16.msra.mxu0 0
      %892 = vmatprep.subr.bf16.mxu0 0
      %893 = vmatpush1.bf16.msra.mxu0 0
      %894 = vmatprep.subr.bf16.mxu0 %v879
      %895 = vmatpush1.bf16.msra.mxu0 %v876
      %896 = vmatprep.subr.bf16.mxu0 %v860
      %897 = vmatpush1.bf16.msra.mxu0 %v857
      %898 = vmatprep.subr.bf16.mxu0 %v836
      %899 = vmatpush1.bf16.msra.mxu0 %v833
      %900 = vmatprep.subr.bf16.mxu0 0
      %901 = vmatpush2.bf16.msra.mxu0 0
      %902 = vmatprep.subr.bf16.mxu0 0
      %903 = vmatpush2.bf16.msra.mxu0 0
      %904 = vmatprep.subr.bf16.mxu0 0
      %905 = vmatpush2.bf16.msra.mxu0 0
      %906 = vmatprep.subr.bf16.mxu0 0
      %907 = vmatpush2.bf16.msra.mxu0 0
      %908 = vmatprep.subr.bf16.mxu0 0
      %909 = vmatpush2.bf16.msra.mxu0 0
      %910 = vmatprep.subr.bf16.mxu0 0
      %911 = vmatpush2.bf16.msra.mxu0 0
      %912 = vmatprep.subr.bf16.mxu0 0
      %913 = vmatpush2.bf16.msra.mxu0 0
      %914 = vmatprep.subr.bf16.mxu0 0
      %915 = vmatpush2.bf16.msra.mxu0 0
      %916 = vmatprep.mubr.bf16.mxu0 0
      %917 = vmatmul.mubr.bf16.gmra.mxu0 %v873
      %v918 = vpop.f32.mrf.mxu0
      %v919 = vadd.f32 %v869, %v918
      %v920 = vpop.f32.mrf.mxu0
      %v921 = vadd.f32 %v869, %v920
      %v922 = vpop.f32.mrf.mxu0
      %v923 = vpop.f32.mrf.mxu0
      %924 = vdwg.mxu0
      %925 = vmatprep.subr.bf16.mxu0 0
      %926 = vmatpush1.bf16.msra.mxu0 0
      %927 = vmatprep.subr.bf16.mxu0 0
      %928 = vmatpush1.bf16.msra.mxu0 0
      %929 = vmatprep.subr.bf16.mxu0 0
      %930 = vmatpush1.bf16.msra.mxu0 0
      %931 = vmatprep.subr.bf16.mxu0 0
      %932 = vmatpush1.bf16.msra.mxu0 0
      %933 = vmatprep.subr.bf16.mxu0 0
      %934 = vmatpush1.bf16.msra.mxu0 0
      %935 = vmatprep.subr.bf16.mxu0 0
      %936 = vmatpush1.bf16.msra.mxu0 %v882
      %937 = vmatprep.subr.bf16.mxu0 0
      %938 = vmatpush1.bf16.msra.mxu0 %v863
      %939 = vmatprep.subr.bf16.mxu0 0
      %940 = vmatpush1.bf16.msra.mxu0 %v839
      %941 = vmatprep.subr.bf16.mxu0 0
      %942 = vmatpush2.bf16.msra.mxu0 0
      %943 = vmatprep.subr.bf16.mxu0 0
      %944 = vmatpush2.bf16.msra.mxu0 0
      %945 = vmatprep.subr.bf16.mxu0 0
      %946 = vmatpush2.bf16.msra.mxu0 0
      %947 = vmatprep.subr.bf16.mxu0 0
      %948 = vmatpush2.bf16.msra.mxu0 0
      %949 = vmatprep.subr.bf16.mxu0 0
      %950 = vmatpush2.bf16.msra.mxu0 0
      %951 = vmatprep.subr.bf16.mxu0 0
      %952 = vmatpush2.bf16.msra.mxu0 0
      %953 = vmatprep.subr.bf16.mxu0 0
      %954 = vmatpush2.bf16.msra.mxu0 0
      %955 = vmatprep.subr.bf16.mxu0 0
      %956 = vmatpush2.bf16.msra.mxu0 0
      %957 = vmatprep.mubr.bf16.mxu0 0
      %958 = vmatmul.mubr.bf16.gmra.mxu0 %v873
      %v959 = vpop.f32.mrf.mxu0
      %v960 = vadd.f32 %v869, %v959
      %v961 = vpop.f32.mrf.mxu0
      %v962 = vpop.f32.mrf.mxu0
      %v963 = vpop.f32.mrf.mxu0
      %964 = vdwg.mxu0
      %v965 = vmul.f32 %v919, 0.1
      %v966 = vmul.f32 %v921, 0.1
      %v967 = vmul.f32 %v960, 0.1
      %v968 = vmax.f32 %v919, %v965
      %v969 = vmax.f32 %v921, %v966
      %v970 = vmax.f32 %v960, %v967
      %v971 = vmul.f32 %v968, %v501
      %v972 = vmul.f32 %v970, %v504
      %974 = vrot.lane.b32.xlu0 %v971, 1
      %v975 = vpop.permute.xlu0 %974
      %980 = vrot.lane.b32.xlu0 %v968, 1
      %v981 = vpop.permute.xlu0 %980
      %982 = vrot.lane.b32.xlu0 %v969, 1
      %v983 = vpop.permute.xlu0 %982
      %984 = vrot.lane.b32.xlu0 %v970, 1
      %v985 = vpop.permute.xlu0 %984
      %v986 = vsel %vm525, %v981, %v983
      %v987 = vsel %vm525, %v983, %v985
      %992 = vrot.lane.b32.xlu0 %v972, 1
      %v993 = vpop.permute.xlu0 %992
      %v995 = vsel %vm525, 0.0, %v975
      %vm996 = vcmask 138240
      %v997 = vsel %vm996, %v995, %v981
      %v998 = vsel %vm996, %v987, %v993
      %v999 = vsel %vm516, %v998, 0.0
      %v1000 = vpack.c.bf16 %v997, %v997
      %v1001 = vpack.c.bf16 %v986, %v986
      %v1002 = vpack.c.bf16 %v999, %v999
      %v1003 = vld [vmem:[%s5] sm:$0xf]
      %v1004 = vsel %vm603, %v1000, 0
      %v1005 = vsel %vm604, %v1001, 0
      %vm1006 = vcmp.ne.s16.totalorder %v634, 0
      %v1007 = vsel %vm640, %v1000, 0
      %v1008 = vsel %vm641, %v1001, 0
      %v1009 = vsel %vm1006, %v1002, 0
      %vm1010 = vcmp.ne.s16.totalorder %v649, 0
      %v1011 = vsel %vm655, %v1000, 0
      %v1012 = vsel %vm656, %v1001, 0
      %v1013 = vsel %vm1010, %v1002, 0
      %vm1014 = vcmp.ne.s16.totalorder %v664, 0
      %v1015 = vsel %vm670, %v1000, 0
      %v1016 = vsel %vm671, %v1001, 0
      %v1017 = vsel %vm1014, %v1002, 0
      %vm1018 = vcmp.ne.s16.totalorder %v679, 0
      %v1019 = vsel %vm685, %v1000, 0
      %v1020 = vsel %vm686, %v1001, 0
      %v1021 = vsel %vm1018, %v1002, 0
      %vm1022 = vcmp.ne.s16.totalorder %v694, 0
      %v1023 = vsel %vm700, %v1000, 0
      %v1024 = vsel %vm701, %v1001, 0
      %v1025 = vsel %vm1022, %v1002, 0
      %v1029 = vrot.slane %v1000, 4
      %v1030 = vrot.slane %v1001, 4
      %v1031 = vrot.slane %v1002, 4
      %1032 = vrot.lane.b32.xlu0 %v1029, 127
      %v1033 = vpop.permute.xlu0 %1032
      %1034 = vrot.lane.b32.xlu0 %v1030, 127
      %v1035 = vpop.permute.xlu0 %1034
      %1036 = vrot.lane.b32.xlu0 %v1031, 127
      %v1037 = vpop.permute.xlu0 %1036
      %v1038 = vsel %vm718, %v1033, %v1035
      %v1039 = vsel %vm718, %v1035, %v1037
      %1043 = vrot.lane.b32.xlu0 %v1007, 126
      %v1044 = vpop.permute.xlu0 %1043
      %1045 = vrot.lane.b32.xlu0 %v1008, 126
      %v1046 = vpop.permute.xlu0 %1045
      %1047 = vrot.lane.b32.xlu0 %v1009, 126
      %v1048 = vpop.permute.xlu0 %1047
      %v1049 = vsel %vm733, %v1044, %v1046
      %v1050 = vsel %vm733, %v1046, %v1048
      %v1054 = vrot.slane %v1011, 4
      %v1055 = vrot.slane %v1012, 4
      %v1056 = vrot.slane %v1013, 4
      %1057 = vrot.lane.b32.xlu0 %v1054, 112
      %v1058 = vpop.permute.xlu0 %1057
      %1059 = vrot.lane.b32.xlu0 %v1055, 112
      %v1060 = vpop.permute.xlu0 %1059
      %1061 = vrot.lane.b32.xlu0 %v1056, 112
      %v1062 = vpop.permute.xlu0 %1061
      %v1063 = vsel %vm748, %v1058, %v1060
      %v1064 = vsel %vm748, %v1060, %v1062
      %1065 = vrot.lane.b32.xlu0 %v1000, 111
      %v1066 = vpop.permute.xlu0 %1065
      %1067 = vrot.lane.b32.xlu0 %v1001, 111
      %v1068 = vpop.permute.xlu0 %1067
      %1069 = vrot.lane.b32.xlu0 %v1002, 111
      %v1070 = vpop.permute.xlu0 %1069
      %v1071 = vsel %vm757, %v1066, %v1068
      %v1072 = vsel %vm757, %v1068, %v1070
      %v1076 = vrot.slane %v1015, 4
      %v1077 = vrot.slane %v1016, 4
      %v1078 = vrot.slane %v1017, 4
      %1079 = vrot.lane.b32.xlu0 %v1076, 110
      %v1080 = vpop.permute.xlu0 %1079
      %1081 = vrot.lane.b32.xlu0 %v1077, 110
      %v1082 = vpop.permute.xlu0 %1081
      %1083 = vrot.lane.b32.xlu0 %v1078, 110
      %v1084 = vpop.permute.xlu0 %1083
      %v1085 = vsel %vm772, %v1080, %v1082
      %v1086 = vsel %vm772, %v1082, %v1084
      %1090 = vrot.lane.b32.xlu0 %v1019, 96
      %v1091 = vpop.permute.xlu0 %1090
      %1092 = vrot.lane.b32.xlu0 %v1020, 96
      %v1093 = vpop.permute.xlu0 %1092
      %1094 = vrot.lane.b32.xlu0 %v1021, 96
      %v1095 = vpop.permute.xlu0 %1094
      %v1096 = vsel %vm787, %v1091, %v1093
      %v1097 = vsel %vm787, %v1093, %v1095
      %1098 = vrot.lane.b32.xlu0 %v1029, 95
      %v1099 = vpop.permute.xlu0 %1098
      %1100 = vrot.lane.b32.xlu0 %v1030, 95
      %v1101 = vpop.permute.xlu0 %1100
      %1102 = vrot.lane.b32.xlu0 %v1031, 95
      %v1103 = vpop.permute.xlu0 %1102
      %v1104 = vsel %vm799, %v1099, %v1101
      %v1105 = vsel %vm799, %v1101, %v1103
      %1109 = vrot.lane.b32.xlu0 %v1023, 94
      %v1110 = vpop.permute.xlu0 %1109
      %1111 = vrot.lane.b32.xlu0 %v1024, 94
      %v1112 = vpop.permute.xlu0 %1111
      %1113 = vrot.lane.b32.xlu0 %v1025, 94
      %v1114 = vpop.permute.xlu0 %1113
      %v1115 = vsel %vm811, %v1110, %v1112
      %v1116 = vsel %vm811, %v1112, %v1114
      %v1119 = vsel %vm824, %v1004, %v1038
      %v1123 = vsel %vm824, %v1005, %v1039
      %v1127 = vsel %vm824, %v1049, %v1063
      %v1131 = vsel %vm824, %v1050, %v1064
      %v1135 = vsel %vm824, %v1071, %v1085
      %v1139 = vsel %vm824, %v1072, %v1086
      %v1143 = vsel %vm824, %v1096, %v1104
      %v1147 = vsel %vm824, %v1097, %v1105
      %v1149 = vld [vmem:[%s6] sm:$0xff]
      %1151 = vset.pattern.permute.xlu0 0
      %1152 = vperm.xlu0 %1151, %v1149
      %v1153 = vpop.permute.xlu0 %1152
      %vm1155 = vcmask 588800
      %v1157 = vsel %vm1155, %v1003, 0
      %v1160 = vsel %vm824, %v1115, 0
      %v1163 = vsel %vm824, %v1116, 0
      %1165 = vmatprep.subr.bf16.mxu0 0
      %1166 = vmatpush1.bf16.msra.mxu0 0
      %1167 = vmatprep.subr.bf16.mxu0 0
      %1168 = vmatpush1.bf16.msra.mxu0 0
      %1169 = vmatprep.subr.bf16.mxu0 0
      %1170 = vmatpush1.bf16.msra.mxu0 0
      %1171 = vmatprep.subr.bf16.mxu0 %v1163
      %1172 = vmatpush1.bf16.msra.mxu0 %v1160
      %1173 = vmatprep.subr.bf16.mxu0 %v1147
      %1174 = vmatpush1.bf16.msra.mxu0 %v1143
      %1175 = vmatprep.subr.bf16.mxu0 %v1139
      %1176 = vmatpush1.bf16.msra.mxu0 %v1135
      %1177 = vmatprep.subr.bf16.mxu0 %v1131
      %1178 = vmatpush1.bf16.msra.mxu0 %v1127
      %1179 = vmatprep.subr.bf16.mxu0 %v1123
      %1180 = vmatpush1.bf16.msra.mxu0 %v1119
      %1181 = vmatprep.subr.bf16.mxu0 0
      %1182 = vmatpush2.bf16.msra.mxu0 0
      %1183 = vmatprep.subr.bf16.mxu0 0
      %1184 = vmatpush2.bf16.msra.mxu0 0
      %1185 = vmatprep.subr.bf16.mxu0 0
      %1186 = vmatpush2.bf16.msra.mxu0 0
      %1187 = vmatprep.subr.bf16.mxu0 0
      %1188 = vmatpush2.bf16.msra.mxu0 0
      %1189 = vmatprep.subr.bf16.mxu0 0
      %1190 = vmatpush2.bf16.msra.mxu0 0
      %1191 = vmatprep.subr.bf16.mxu0 0
      %1192 = vmatpush2.bf16.msra.mxu0 0
      %1193 = vmatprep.subr.bf16.mxu0 0
      %1194 = vmatpush2.bf16.msra.mxu0 0
      %1195 = vmatprep.subr.bf16.mxu0 0
      %1196 = vmatpush2.bf16.msra.mxu0 0
      %1197 = vmatprep.mubr.bf16.mxu0 0
      %1198 = vmatmul.mubr.bf16.gmra.mxu0 %v1157
      %v1199 = vpop.f32.mrf.mxu0
      %v1200 = vadd.f32 %v1153, %v1199
      %v1201 = vpop.f32.mrf.mxu0
      %v1202 = vadd.f32 %v1153, %v1201
      %v1203 = vpop.f32.mrf.mxu0
      %v1204 = vpop.f32.mrf.mxu0
      %1205 = vdwg.mxu0
      %v1206 = vmul.f32 %v1200, 0.1
      %v1207 = vmul.f32 %v1202, 0.1
      %v1208 = vmax.f32 %v1200, %v1206
      %v1209 = vmax.f32 %v1202, %v1207
      %v1210 = vld [vmem:[%s7] sm:$0xf]
      %v1212 = vpack.c.bf16 %v499, %v499
      %v1213 = vpack.c.bf16 %v511, %v511
      %v1214 = vld [vmem:[%s8] sm:$0xff]
      %1216 = vset.pattern.permute.xlu0 0
      %1217 = vperm.xlu0 %1216, %v1214
      %v1218 = vpop.permute.xlu0 %1217
      %vm1220 = vcmask 31744
      %v1222 = vsel %vm1220, %v1210, 0
      %v1225 = vsel %vm814, %v1212, 0
      %v1228 = vsel %vm814, %v1213, 0
      %1230 = vmatprep.subr.bf16.mxu0 0
      %1231 = vmatpush1.bf16.msra.mxu0 0
      %1232 = vmatprep.subr.bf16.mxu0 0
      %1233 = vmatpush1.bf16.msra.mxu0 0
      %1234 = vmatprep.subr.bf16.mxu0 0
      %1235 = vmatpush1.bf16.msra.mxu0 0
      %1236 = vmatprep.subr.bf16.mxu0 0
      %1237 = vmatpush1.bf16.msra.mxu0 0
      %1238 = vmatprep.subr.bf16.mxu0 0
      %1239 = vmatpush1.bf16.msra.mxu0 0
      %1240 = vmatprep.subr.bf16.mxu0 0
      %1241 = vmatpush1.bf16.msra.mxu0 0
      %1242 = vmatprep.subr.bf16.mxu0 0
      %1243 = vmatpush1.bf16.msra.mxu0 0
      %1244 = vmatprep.subr.bf16.mxu0 %v1228
      %1245 = vmatpush1.bf16.msra.mxu0 %v1225
      %1246 = vmatprep.subr.bf16.mxu0 0
      %1247 = vmatpush2.bf16.msra.mxu0 0
      %1248 = vmatprep.subr.bf16.mxu0 0
      %1249 = vmatpush2.bf16.msra.mxu0 0
      %1250 = vmatprep.subr.bf16.mxu0 0
      %1251 = vmatpush2.bf16.msra.mxu0 0
      %1252 = vmatprep.subr.bf16.mxu0 0
      %1253 = vmatpush2.bf16.msra.mxu0 0
      %1254 = vmatprep.subr.bf16.mxu0 0
      %1255 = vmatpush2.bf16.msra.mxu0 0
      %1256 = vmatprep.subr.bf16.mxu0 0
      %1257 = vmatpush2.bf16.msra.mxu0 0
      %1258 = vmatprep.subr.bf16.mxu0 0
      %1259 = vmatpush2.bf16.msra.mxu0 0
      %1260 = vmatprep.subr.bf16.mxu0 0
      %1261 = vmatpush2.bf16.msra.mxu0 0
      %1262 = vmatprep.mubr.bf16.mxu0 0
      %1263 = vmatmul.mubr.bf16.gmra.mxu0 %v1222
      %v1264 = vpop.f32.mrf.mxu0
      %v1265 = vadd.f32 %v1218, %v1264
      %v1266 = vpop.f32.mrf.mxu0
      %v1267 = vadd.f32 %v1218, %v1266
      %v1268 = vpop.f32.mrf.mxu0
      %v1269 = vpop.f32.mrf.mxu0
      %1270 = vdwg.mxu0
      %v1271 = vadd.f32 %v1208, %v1265
      %v1272 = vadd.f32 %v1209, %v1267
      %1273 = vst [vmem:[%s488] sm:$0xff] %v1271
      %1274 = vst [vmem:[%s488 + $0x8] sm:$0xff] %v1272
      %s1275 = smul.u32 2, %s25
      %p1276 = scmp.lt.s32.totalorder %s24, 1
      %s1277 = scalar_select %p1276, %s24, 1
      %p1278 = scmp.lt.s32.totalorder %s1275, 1
      %s1279 = scalar_select %p1278, %s1275, 1
      %s1280 = smul.addr %s1277, 2
      %s1281 = sadd.s32 %s1279, %s1280
      %s1282 = smul.addr %s1281, 8
      %s1283 = scalar_lea.vmem %s9, %s1282
      // Predicated region
      $region57: #{residual_block_pallas.1} parent=55 // pred_check
        %p1284 = pneg %p278
      $region58: #{residual_block_pallas.1} parent=55 // pred_check_branch
        %1286 = sbr.rel (%p1284) target = $region60
      $region59: #{residual_block_pallas.1} parent=55 // pred_region
        %s1287 = smul.u32 2, %s25
      $region60: #{residual_block_pallas.1} parent=55 // pred_fallthru
        _
    $region56: #{residual_block_pallas.1} parent=5 // pred_fallthru
      _
    %p1288 = scmp.le.s32.totalorder 2, %s15
    // Predicated region
    $region61: #{residual_block_pallas.1} parent=5 // pred_check
      %p1289 = pneg %p1288
    $region62: #{residual_block_pallas.1} parent=5 // pred_check_branch
      %1291 = sbr.rel (%p1289) target = $region64
    $region63: #{residual_block_pallas.1} parent=5 // pred_region
      %s1292 = ssub.s32 %s15, 2
      // Predicated region
      $region65: #{residual_block_pallas.1} parent=63 // pred_check
        %p1293 = pneg %p284
      $region66: #{residual_block_pallas.1} parent=63 // pred_check_branch
        %1295 = sbr.rel (%p1293) target = $region68
      $region67: #{residual_block_pallas.1} parent=63 // pred_region
        %s1296 = smul.u32 2, %s27
        %p1297 = scmp.lt.s32.totalorder %s26, 1
        %s1298 = scalar_select %p1297, %s26, 1
        %p1299 = scmp.lt.s32.totalorder %s1296, 1
        %s1300 = scalar_select %p1299, %s1296, 1
        %s1301 = smul.addr %s1298, 2
        %s1302 = sadd.s32 %s1300, %s1301
        %s1303 = smul.addr %s1302, 8
        %s1304 = scalar_lea.vmem %s9, %s1303
      $region68: #{residual_block_pallas.1} parent=63 // pred_fallthru
        _
    $region64: #{residual_block_pallas.1} parent=5 // pred_fallthru
      _
  $region6: #{residual_block_pallas.1} parent=0 // loop_footer
    %s19 = sadd.s32 1, %s15
  $region7: #{residual_block_pallas.1} parent=0 // loop_footer_branch
    %14 = sbr.rel target = $region3
  $region8: #{residual_block_pallas.1} parent=0 // loop_exit
    _

</llo_original>
